<compile_context>
chip_gen: v5e
topology: v5e:2x2
jax: 0.10.0
libtpu: 0.0.40
codegen_flags: <defaults>
</compile_context>

<pallas_src>
import functools
from typing import NamedTuple, Optional, Union

import jax
import jax.numpy as jnp
from jax import lax
from jax.experimental import pallas as pl
from jax.experimental.pallas import tpu as pltpu


# ---------------------------------------------------------------------------
# Hardware-aware defaults
# ---------------------------------------------------------------------------

def _device_kind() -> str:
    try:
        return jax.devices()[0].device_kind.lower()
    except Exception:
        return ""


def _vmem_capacity_bytes() -> int:
    try:
        return int(pltpu.get_tpu_info().vmem_capacity_bytes)
    except Exception:
        # Conservative fallback: v7x has 64 MiB per TensorCore, older gens 128.
        return (64 << 20) if "v7" in _device_kind() else (128 << 20)


def _round_up(x: int, m: int) -> int:
    return ((x + m - 1) // m) * m


def _default_vocab_tile(hidden_size: int, vocab_size: int, itemsize: int) -> int:
    """Largest vocab tile whose double-buffered (H, tv) weight stream stays
    comfortably inside this generation's VMEM (v5e/v6e ~2048, v7x ~1024)."""
    budget = int(_vmem_capacity_bytes() * 0.85)
    tv = (budget * 6 // 10) // max(1, 2 * hidden_size * itemsize)
    tv = max(128, (tv // 128) * 128)
    tv = min(tv, 2048)                         # diminishing returns past ~2K
    tv = min(tv, _round_up(vocab_size, 128))   # never bigger than (padded) V
    return max(128, tv)


# ---------------------------------------------------------------------------
# One-time lm_head weight re-layout (cache this in the serving stack)
# ---------------------------------------------------------------------------

class PreparedLMHead(NamedTuple):
    tiles: jax.Array       # [num_tiles, H, tv], contiguous per-tile
    vocab_size: int
    hidden_size: int
    tile_v: int


def prepare_lm_head_weight(weight: jax.Array,
                           tv: Optional[int] = None) -> PreparedLMHead:
    """Transpose + pre-tile the torch-layout [V, H] lm_head weight ONCE into
    [num_tiles, H, tv] so every per-step kernel DMA is a contiguous tile and
    no per-call transpose copy is ever materialized again."""
    v, h = weight.shape
    itemsize = jnp.dtype(weight.dtype).itemsize
    if tv is None:
        tv = _default_vocab_tile(h, v, itemsize)
    tv = max(128, (int(tv) // 128) * 128)
    v_pad = _round_up(v, tv)
    nt = v_pad // tv
    w = jnp.pad(weight, ((0, v_pad - v), (0, 0)))             # [V_pad, H]
    tiles = jnp.transpose(w.reshape(nt, tv, h), (0, 2, 1))    # [nt, H, tv]
    return PreparedLMHead(tiles=tiles, vocab_size=int(v),
                          hidden_size=int(h), tile_v=int(tv))


# ---------------------------------------------------------------------------
# Stateless counter-based PRNG (pure int32 VPU ops)
# ---------------------------------------------------------------------------

def _i32const(x):
    x &= 0xFFFFFFFF
    return x - (1 << 32) if x >= (1 << 31) else x


_MIX1 = _i32const(0x7FEB352D)     # lowbias32 multipliers
_MIX2 = _i32const(0x846CA68B)
_GOLD = _i32const(0x9E3779B9)
_SEEDC = _i32const(0x85EBCA6B)


def _shr_logical(x, k):
    return jnp.right_shift(x, k) & ((1 << (32 - k)) - 1)


def _hash32(x):
    """Single lowbias32-style avalanche pass (int32, wrap-around arithmetic)."""
    x = x ^ _shr_logical(x, 16)
    x = x * _MIX1
    x = x ^ _shr_logical(x, 15)
    x = x * _MIX2
    x = x ^ _shr_logical(x, 16)
    return x


# ---------------------------------------------------------------------------
# Kernel: streams contiguous vocab tiles of the lm_head, keeps an online
# logsumexp and a running Gumbel-max winner per row; per-split partials out.
# ---------------------------------------------------------------------------

def _sampler_kernel(meta_ref,                       # (2,) int32 SMEM: [seed, any_sampled]
                    h_ref,                          # (TM, H)  hidden rows (resident)
                    wt_ref,                         # (H, TV)  contiguous weight tile
                    invt_ref,                       # (TM, 1)  1/temperature
                    greedy_ref,                     # (TM, 1)  1.0 greedy / 0.0 sample
                    lse_ref, key_ref, idx_ref, score_ref,   # per-split partials
                    m_sc, l_sc, bk_sc, bi_sc, bs_sc,        # scratch
                    *, vocab_size, tiles_per_split):
    c = pl.program_id(0)             # vocab split (only >1 on multi-TC opt-in)
    j = pl.program_id(1)             # vocab tile within the split (reduction)
    nj = pl.num_programs(1)

    @pl.when(j == 0)
    def _init():
        m_sc[...] = jnp.full_like(m_sc, -jnp.inf)
        l_sc[...] = jnp.zeros_like(l_sc)
        bk_sc[...] = jnp.full_like(bk_sc, -jnp.inf)
        bi_sc[...] = jnp.zeros_like(bi_sc)
        bs_sc[...] = jnp.full_like(bs_sc, -jnp.inf)

    # (TM, H) @ (H, TV) -> (TM, TV) f32 on the MXU (native orientation).
    logits = jnp.dot(h_ref[...], wt_ref[...], preferred_element_type=jnp.float32)
    score = logits * invt_ref[...]           # temperature via precomputed 1/T

    tm, tv = score.shape
    col0 = (c * tiles_per_split + j) * tv     # global first column of this tile
    col = lax.broadcasted_iota(jnp.int32, (1, tv), 1) + col0
    score = jnp.where(col < vocab_size, score, -jnp.inf)   # vocab-tail mask

    # ---- online logsumexp over the vocab axis ------------------------------
    m_old = m_sc[...]
    m_new = jnp.maximum(m_old, score.max(-1, keepdims=True))
    m_safe = jnp.maximum(m_new, -1e30)        # avoids -inf - -inf on masked tiles
    l_sc[...] = (l_sc[...] * jnp.exp(m_old - m_safe)
                 + jnp.exp(score - m_safe).sum(-1, keepdims=True))
    m_sc[...] = m_new

    # ---- running per-row winner (greedy argmax / Gumbel-max sample) ---------
    big = jnp.int32(2147483647)

    def _update_winner(key):
        key_max = key.max(-1, keepdims=True)
        sel = key == key_max
        tile_idx = jnp.where(sel, col, big).min(-1, keepdims=True)
        tile_score = jnp.where(sel, score, -jnp.inf).max(-1, keepdims=True)
        better = key_max > bk_sc[...]
        bk_sc[...] = jnp.where(better, key_max, bk_sc[...])
        bi_sc[...] = jnp.where(better, tile_idx, bi_sc[...])
        bs_sc[...] = jnp.where(better, tile_score, bs_sc[...])

    any_sampled = meta_ref[1] != 0

    @pl.when(any_sampled)
    def _sampled():
        # Stateless hash noise; greedy rows get noise * 0 so key == score.
        row = lax.broadcasted_iota(jnp.int32, (tm, 1), 0)
        ctr = row * _GOLD + col * _SEEDC + meta_ref[0]
        bits = _hash32(ctr)
        u = ((bits & 0x00FFFFFF).astype(jnp.float32) + 0.5) * (1.0 / (1 << 24))
        gumbel = -jnp.log(-jnp.log(u))        # finite: u strictly inside (0, 1)
        _update_winner(score + gumbel * (1.0 - greedy_ref[...]))

    @pl.when(jnp.logical_not(any_sampled))
    def _greedy_only():
        _update_winner(score)                 # all-greedy batches skip the PRNG

    # ---- finalize this split's partial results ------------------------------
    @pl.when(j == nj - 1)
    def _finalize():
        l = l_sc[...]
        lse_ref[...] = jnp.where(l > 0.0, m_sc[...] + jnp.log(l), -jnp.inf)
        key_ref[...] = bk_sc[...]
        idx_ref[...] = bi_sc[...]
        score_ref[...] = bs_sc[...]


# ---------------------------------------------------------------------------
# Jitted wrapper around pallas_call
# ---------------------------------------------------------------------------

@functools.partial(jax.jit, static_argnames=("vocab_size", "n_splits",
                                              "vmem_limit", "core_split"))
def _logits_processor_pallas(h_sel, w_tiles, temperature, greedy_mask, seed,
                             *, vocab_size, n_splits, vmem_limit, core_split):
    n, hdim = h_sel.shape
    nt, hdim_w, tv = w_tiles.shape
    assert hdim_w == hdim, "prepared weight hidden size mismatch"

    # Row tile = whole batch (padded to a multiple of 16 for bf16 packing) so
    # the lm_head weight streams from HBM exactly once.
    n_pad = max(16, _round_up(n, 16))
    pad = n_pad - n
    h_pad = jnp.pad(h_sel, ((0, pad), (0, 0)))

    t32 = temperature.astype(jnp.float32)
    greedy_eff = jnp.logical_or(greedy_mask, t32 <= 0.0)   # T<=0 -> greedy
    safe_t = jnp.where(t32 > 0.0, t32, 1.0)
    invt = jnp.pad((1.0 / safe_t).reshape(n, 1), ((0, pad), (0, 0)),
                   constant_values=1.0)
    greedy = jnp.pad(greedy_eff.astype(jnp.float32).reshape(n, 1),
                     ((0, pad), (0, 0)), constant_values=1.0)

    any_sampled = jnp.any(jnp.logical_not(greedy_eff)).astype(jnp.int32)
    meta = jnp.stack([jnp.asarray(seed, jnp.int32), any_sampled])

    s = max(1, min(n_splits, nt))             # vocab splits (>=2 only on opt-in)
    tps = pl.cdiv(nt, s)                      # vocab tiles per split
    last_tile = nt - 1

    kernel = functools.partial(_sampler_kernel, vocab_size=vocab_size,
                               tiles_per_split=tps)

    if core_split and s > 1:
        split_sem = pltpu.CORE_PARALLEL       # v7x: shard split across 2 TCs
    else:
        split_sem = pltpu.PARALLEL

    out_shape = (
        jax.ShapeDtypeStruct((s, n_pad, 1), jnp.float32),   # partial logsumexp
        jax.ShapeDtypeStruct((s, n_pad, 1), jnp.float32),   # best sampling key
        jax.ShapeDtypeStruct((s, n_pad, 1), jnp.int32),     # best token id
        jax.ShapeDtypeStruct((s, n_pad, 1), jnp.float32),   # score at best id
    )
    out_specs = tuple(
        pl.BlockSpec((None, n_pad, 1), lambda c, j, meta: (c, 0, 0))
        for _ in range(4))

    lse_p, key_p, idx_p, sc_p = pl.pallas_call(
        kernel,
        out_shape=out_shape,
        grid_spec=pltpu.PrefetchScalarGridSpec(
            num_scalar_prefetch=1,
            grid=(s, tps),
            in_specs=[
                # resident blocks (constant index maps -> DMA'd once)
                pl.BlockSpec((n_pad, hdim), lambda c, j, meta: (0, 0)),
                # contiguous weight tile; overhang iterations (only if s does
                # not divide nt) clamp to the last tile and are fully masked.
                pl.BlockSpec((None, hdim, tv),
                             lambda c, j, meta:
                             (jnp.minimum(c * tps + j, last_tile), 0, 0)),
                pl.BlockSpec((n_pad, 1), lambda c, j, meta: (0, 0)),
                pl.BlockSpec((n_pad, 1), lambda c, j, meta: (0, 0)),
            ],
            out_specs=out_specs,
            scratch_shapes=[
                pltpu.VMEM((n_pad, 1), jnp.float32),   # running max
                pltpu.VMEM((n_pad, 1), jnp.float32),   # running sum-exp
                pltpu.VMEM((n_pad, 1), jnp.float32),   # best sampling key
                pltpu.VMEM((n_pad, 1), jnp.int32),     # best token id
                pltpu.VMEM((n_pad, 1), jnp.float32),   # score at best id
            ],
        ),
        compiler_params=pltpu.CompilerParams(
            dimension_semantics=(split_sem, pltpu.ARBITRARY),
            vmem_limit_bytes=vmem_limit,
        ),
    )(meta, h_pad, w_tiles, invt, greedy)

    # Tiny cross-split epilogue (no-op cost at s == 1): combine the partial
    # logsumexps and pick the split holding the globally best key.
    lse = jax.nn.logsumexp(lse_p[..., 0], axis=0)                 # (n_pad,)
    win = jnp.argmax(key_p[..., 0], axis=0)                       # (n_pad,)
    ids = jnp.take_along_axis(idx_p[..., 0], win[None, :], axis=0)[0]
    chosen_score = jnp.take_along_axis(sc_p[..., 0], win[None, :], axis=0)[0]
    logprobs = chosen_score - lse
    return ids[:n].astype(jnp.int32), logprobs[:n]


# ---------------------------------------------------------------------------
# Public entry point (functional equivalent of LogitsProcessor.forward)
# ---------------------------------------------------------------------------

def logits_processor(hidden_states,
                     weight: Union[PreparedLMHead, jax.Array],
                     lm_head_indices, temperature, greedy_mask,
                     seed=0, n_splits: Optional[int] = None,
                     core_split: bool = False):
    """Returns (next_token_ids, chosen_logprobs).

    `weight` should be a PreparedLMHead (prepare once, reuse every decode
    step).  A raw torch-layout [V, H] array is also accepted for API parity,
    but then the one-time re-layout happens on every call - don't do that in
    a serving loop.  Token ids are int32 (torch uses int64; values identical).
    On v7x pass n_splits=2, core_split=True to use both TensorCores.
    """
    if lm_head_indices.shape[0] == 0:
        return (jnp.empty((0,), dtype=jnp.int32),
                jnp.empty((0,), dtype=jnp.float32))

    prepared = (weight if isinstance(weight, PreparedLMHead)
                else prepare_lm_head_weight(weight))
    h_sel = jnp.take(hidden_states, lm_head_indices, axis=0)   # glue gather

    n = int(lm_head_indices.shape[0])
    n_pad = max(16, _round_up(n, 16))
    hdim, tv = prepared.hidden_size, prepared.tile_v
    w_isz = jnp.dtype(prepared.tiles.dtype).itemsize
    h_isz = jnp.dtype(h_sel.dtype).itemsize

    if n_splits is None:
        n_splits = 1   # single-TC v5e/v6e: a vocab split only adds overhead

    # VMEM working set: double-buffered contiguous weight tile + resident
    # hidden/temperature blocks + f32 compute temporaries.  Clamp to 85% of
    # the physical VMEM of this generation (64 MiB on v7x, 128 MiB on v5e/v6e).
    est = (2 * hdim * tv * w_isz
           + 2 * n_pad * (hdim * h_isz + 8)
           + 8 * n_pad * tv * 4
           + (4 << 20))
    budget = int(_vmem_capacity_bytes() * 0.85)
    vmem_limit = int(min(max(est, 32 << 20), budget))

    return _logits_processor_pallas(
        h_sel, prepared.tiles, temperature, greedy_mask,
        jnp.asarray(seed, dtype=jnp.int32),
        vocab_size=prepared.vocab_size, n_splits=int(n_splits),
        vmem_limit=vmem_limit, core_split=bool(core_split))


# ---------------------------------------------------------------------------
# Self-test
# ---------------------------------------------------------------------------

if __name__ == "__main__":
    key = jax.random.PRNGKey(0)
    k_h, k_w, k_idx = jax.random.split(key, 3)

    # Small, deliberately non-aligned shapes: V not a multiple of the vocab
    # tile and N not a multiple of 16 exercise the masking / padding paths.
    T, H, V, N = 32, 256, 1000, 10

    hidden_states = jax.random.normal(k_h, (T, H), dtype=jnp.float32).astype(jnp.bfloat16)
    weight = (jax.random.normal(k_w, (V, H), dtype=jnp.float32)
              * 0.05).astype(jnp.bfloat16)
    lm_head_indices = jnp.sort(
        jax.random.permutation(k_idx, T)[:N]).astype(jnp.int32)
    greedy_mask = (jnp.arange(N) % 2 == 0)
    temperature = jnp.where(greedy_mask, 1.0, 0.7).astype(jnp.float32)

    # One-time weight re-layout (serving stacks must cache this object).
    prepared = prepare_lm_head_weight(weight)

    next_token_ids, chosen_logprobs = logits_processor(
        hidden_states, prepared, lm_head_indices, temperature, greedy_mask,
        seed=1234)
    jax.block_until_ready((next_token_ids, chosen_logprobs))

    # Reference (same bf16-quantized inputs, f32 math).
    h_sel = jnp.take(hidden_states, lm_head_indices, axis=0).astype(jnp.float32)
    logits_ref = (h_sel @ weight.astype(jnp.float32).T) / temperature[:, None]
    logp_ref = jax.nn.log_softmax(logits_ref, axis=-1)

    assert next_token_ids.shape == (N,) and chosen_logprobs.shape == (N,)
    assert bool(jnp.all((next_token_ids >= 0) & (next_token_ids < V)))
    assert bool(jnp.all(jnp.isfinite(chosen_logprobs)))
    assert bool(jnp.all(chosen_logprobs <= 1e-3))
    lp_at_chosen = jnp.take_along_axis(
        logp_ref, next_token_ids[:, None], axis=1)[:, 0]
    assert bool(jnp.all(jnp.abs(chosen_logprobs - lp_at_chosen) < 5e-3))
    # Greedy rows must (numerically) pick the argmax token.
    greedy_best = jnp.max(logp_ref, axis=-1)
    assert bool(jnp.all(jnp.where(greedy_mask,
                                  lp_at_chosen >= greedy_best - 1e-3, True)))

    # All-greedy batch exercises the PRNG-skip (any_sampled == 0) branch.
    all_ids, all_lp = logits_processor(
        hidden_states, prepared, lm_head_indices, temperature,
        jnp.ones((N,), dtype=bool), seed=7)
    jax.block_until_ready((all_ids, all_lp))
    assert bool(jnp.all(all_ids == jnp.argmax(logp_ref, axis=-1).astype(jnp.int32)))

    # Empty-batch path (mirrors the torch early-exit branch).
    empty_ids, empty_lp = logits_processor(
        hidden_states, prepared, jnp.empty((0,), jnp.int32), temperature,
        greedy_mask)
    jax.block_until_ready((empty_ids, empty_lp))
    assert empty_ids.shape == (0,) and empty_lp.shape == (0,)

    print("KERNEL_OK")
</pallas_src>

<mosaic_0001>
module attributes {stable_mosaic.version = 11 : i64} {
  func.func @_sampler_kernel(%arg0: i32, %arg1: i32, %arg2: memref<2xi32, #tpu.memory_space<smem>>, %arg3: memref<16x256xbf16, #tpu.memory_space<vmem>>, %arg4: memref<1x256x1024xbf16, #tpu.memory_space<vmem>>, %arg5: memref<16x1xf32, #tpu.memory_space<vmem>>, %arg6: memref<16x1xf32, #tpu.memory_space<vmem>>, %arg7: memref<1x16x1xf32, #tpu.memory_space<vmem>>, %arg8: memref<1x16x1xf32, #tpu.memory_space<vmem>>, %arg9: memref<1x16x1xi32, #tpu.memory_space<vmem>>, %arg10: memref<1x16x1xf32, #tpu.memory_space<vmem>>, %arg11: memref<16x1xf32, #tpu.memory_space<vmem>>, %arg12: memref<16x1xf32, #tpu.memory_space<vmem>>, %arg13: memref<16x1xf32, #tpu.memory_space<vmem>>, %arg14: memref<16x1xi32, #tpu.memory_space<vmem>>, %arg15: memref<16x1xf32, #tpu.memory_space<vmem>>) attributes {dimension_semantics = [#tpu.dimension_semantics<parallel>, #tpu.dimension_semantics<arbitrary>], iteration_bounds = array<i64: 1, 1>, scalar_prefetch = 1 : i64, scratch_operands = 5 : i64, tpu.core_type = #tpu.core_type<tc>, window_params = [{pipeline_mode = #tpu.pipeline_mode<synchronous>, transform_indices = @transform_0, window_bounds = array<i64: 16, 256>}, {transform_indices = @transform_1, window_bounds = array<i64: 1, 256, 1024>}, {pipeline_mode = #tpu.pipeline_mode<synchronous>, transform_indices = @transform_2, window_bounds = array<i64: 16, 1>}, {pipeline_mode = #tpu.pipeline_mode<synchronous>, transform_indices = @transform_3, window_bounds = array<i64: 16, 1>}, {transform_indices = @transform_4, window_bounds = array<i64: 1, 16, 1>}, {transform_indices = @transform_5, window_bounds = array<i64: 1, 16, 1>}, {transform_indices = @transform_6, window_bounds = array<i64: 1, 16, 1>}, {transform_indices = @transform_7, window_bounds = array<i64: 1, 16, 1>}]} {
    %c0_i32 = arith.constant 0 : i32
    %0 = arith.cmpi eq, %arg1, %c0_i32 : i32
    %1 = arith.extui %0 : i1 to i32
    %c0_i32_0 = arith.constant 0 : i32
    %2 = arith.cmpi ne, %1, %c0_i32_0 : i32
    scf.if %2 {
      %cst_25 = arith.constant 0xFF800000 : f32
      %50 = vector.broadcast %cst_25 : f32 to vector<16x1xf32>
      %c0_26 = arith.constant 0 : index
      %c0_27 = arith.constant 0 : index
      %51 = vector.load %arg11[%c0_26, %c0_27] : memref<16x1xf32, #tpu.memory_space<vmem>>, vector<16x1xf32>
      tpu.vector_store %arg11[%c0_26, %c0_27], %50 {strides = array<i32>} : memref<16x1xf32, #tpu.memory_space<vmem>>, vector<16x1xf32>,
      %cst_28 = arith.constant 0.000000e+00 : f32
      %52 = vector.broadcast %cst_28 : f32 to vector<16x1xf32>
      %c0_29 = arith.constant 0 : index
      %c0_30 = arith.constant 0 : index
      %53 = vector.load %arg12[%c0_29, %c0_30] : memref<16x1xf32, #tpu.memory_space<vmem>>, vector<16x1xf32>
      tpu.vector_store %arg12[%c0_29, %c0_30], %52 {strides = array<i32>} : memref<16x1xf32, #tpu.memory_space<vmem>>, vector<16x1xf32>,
      %cst_31 = arith.constant 0xFF800000 : f32
      %54 = vector.broadcast %cst_31 : f32 to vector<16x1xf32>
      %c0_32 = arith.constant 0 : index
      %c0_33 = arith.constant 0 : index
      %55 = vector.load %arg13[%c0_32, %c0_33] : memref<16x1xf32, #tpu.memory_space<vmem>>, vector<16x1xf32>
      tpu.vector_store %arg13[%c0_32, %c0_33], %54 {strides = array<i32>} : memref<16x1xf32, #tpu.memory_space<vmem>>, vector<16x1xf32>,
      %c0_i32_34 = arith.constant 0 : i32
      %56 = vector.broadcast %c0_i32_34 : i32 to vector<16x1xi32>
      %c0_35 = arith.constant 0 : index
      %c0_36 = arith.constant 0 : index
      %57 = vector.load %arg14[%c0_35, %c0_36] : memref<16x1xi32, #tpu.memory_space<vmem>>, vector<16x1xi32>
      tpu.vector_store %arg14[%c0_35, %c0_36], %56 {strides = array<i32>} : memref<16x1xi32, #tpu.memory_space<vmem>>, vector<16x1xi32>,
      %cst_37 = arith.constant 0xFF800000 : f32
      %58 = vector.broadcast %cst_37 : f32 to vector<16x1xf32>
      %c0_38 = arith.constant 0 : index
      %c0_39 = arith.constant 0 : index
      %59 = vector.load %arg15[%c0_38, %c0_39] : memref<16x1xf32, #tpu.memory_space<vmem>>, vector<16x1xf32>
      tpu.vector_store %arg15[%c0_38, %c0_39], %58 {strides = array<i32>} : memref<16x1xf32, #tpu.memory_space<vmem>>, vector<16x1xf32>,
    } else {
    }
    %c0 = arith.constant 0 : index
    %c0_1 = arith.constant 0 : index
    %3 = vector.load %arg3[%c0, %c0_1] : memref<16x256xbf16, #tpu.memory_space<vmem>>, vector<16x256xbf16>
    %c0_2 = arith.constant 0 : index
    %c0_3 = arith.constant 0 : index
    %c0_4 = arith.constant 0 : index
    %4 = vector.load %arg4[%c0_2, %c0_3, %c0_4] : memref<1x256x1024xbf16, #tpu.memory_space<vmem>>, vector<1x256x1024xbf16>
    %5 = vector.shape_cast %4 : vector<1x256x1024xbf16> to vector<256x1024xbf16>
    %cst = arith.constant dense<0.000000e+00> : vector<16x1024xf32>
    %6 = tpu.matmul %3, %5, %cst {dimension_numbers = #tpu.dot_dimension_numbers<[1], [0], [0], [1], [0, 0, 1, 1], [], []>} : vector<16x256xbf16>, vector<256x1024xbf16>, vector<16x1024xf32> -> vector<16x1024xf32>
    %c0_5 = arith.constant 0 : index
    %c0_6 = arith.constant 0 : index
    %7 = vector.load %arg5[%c0_5, %c0_6] : memref<16x1xf32, #tpu.memory_space<vmem>>, vector<16x1xf32>
    %8 = vector.broadcast %7 : vector<16x1xf32> to vector<16x1024xf32>
    %9 = arith.mulf %6, %8 : vector<16x1024xf32>
    %c1_i32 = arith.constant 1 : i32
    %10 = arith.muli %arg0, %c1_i32 : i32
    %11 = arith.addi %10, %arg1 : i32
    %c1024_i32 = arith.constant 1024 : i32
    %12 = arith.muli %11, %c1024_i32 : i32
    %13 = tpu.iota {dimensions = array<i32: 1>} : vector<1x1024xi32>
    %14 = vector.broadcast %12 : i32 to vector<1x1024xi32>
    %15 = arith.addi %13, %14 : vector<1x1024xi32>
    %c1000_i32 = arith.constant 1000 : i32
    %16 = vector.broadcast %c1000_i32 : i32 to vector<1x1024xi32>
    %17 = arith.cmpi slt, %15, %16 : vector<1x1024xi32>
    %cst_7 = arith.constant 0xFF800000 : f32
    %18 = vector.shape_cast %17 : vector<1x1024xi1> to vector<1x1024xi1>
    %19 = vector.broadcast %18 : vector<1x1024xi1> to vector<16x1024xi1>
    %20 = vector.broadcast %cst_7 : f32 to vector<16x1024xf32>
    %21 = arith.select %19, %9, %20 : vector<16x1024xi1>, vector<16x1024xf32>
    %c0_8 = arith.constant 0 : index
    %c0_9 = arith.constant 0 : index
    %22 = vector.load %arg11[%c0_8, %c0_9] : memref<16x1xf32, #tpu.memory_space<vmem>>, vector<16x1xf32>
    %cst_10 = arith.constant dense<0xFF800000> : vector<16xf32>
    %23 = vector.multi_reduction <maximumf>, %21, %cst_10 [1] : vector<16x1024xf32> to vector<16xf32>
    %24 = vector.shape_cast %23 : vector<16xf32> to vector<16x1xf32>
    %25 = arith.maximumf %22, %24 : vector<16x1xf32>
    %cst_11 = arith.constant -1.000000e+30 : f32
    %26 = vector.broadcast %cst_11 : f32 to vector<16x1xf32>
    %27 = arith.maximumf %25, %26 : vector<16x1xf32>
    %c0_12 = arith.constant 0 : index
    %c0_13 = arith.constant 0 : index
    %28 = vector.load %arg12[%c0_12, %c0_13] : memref<16x1xf32, #tpu.memory_space<vmem>>, vector<16x1xf32>
    %29 = arith.subf %22, %27 : vector<16x1xf32>
    %30 = math.exp %29 : vector<16x1xf32>
    %31 = arith.mulf %28, %30 : vector<16x1xf32>
    %32 = vector.broadcast %27 : vector<16x1xf32> to vector<16x1024xf32>
    %33 = arith.subf %21, %32 : vector<16x1024xf32>
    %34 = math.exp %33 : vector<16x1024xf32>
    %cst_14 = arith.constant dense<0.000000e+00> : vector<16xf32>
    %35 = vector.multi_reduction <add>, %34, %cst_14 [1] : vector<16x1024xf32> to vector<16xf32>
    %36 = vector.shape_cast %35 : vector<16xf32> to vector<16x1xf32>
    %37 = arith.addf %31, %36 : vector<16x1xf32>
    %c0_15 = arith.constant 0 : index
    %c0_16 = arith.constant 0 : index
    %38 = vector.load %arg12[%c0_15, %c0_16] : memref<16x1xf32, #tpu.memory_space<vmem>>, vector<16x1xf32>
    tpu.vector_store %arg12[%c0_15, %c0_16], %37 {strides = array<i32>} : memref<16x1xf32, #tpu.memory_space<vmem>>, vector<16x1xf32>,
    %c0_17 = arith.constant 0 : index
    %c0_18 = arith.constant 0 : index
    %39 = vector.load %arg11[%c0_17, %c0_18] : memref<16x1xf32, #tpu.memory_space<vmem>>, vector<16x1xf32>
    tpu.vector_store %arg11[%c0_17, %c0_18], %25 {strides = array<i32>} : memref<16x1xf32, #tpu.memory_space<vmem>>, vector<16x1xf32>,
    %c1 = arith.constant 1 : index
    %40 = memref.load %arg2[%c1] : memref<2xi32, #tpu.memory_space<smem>>
    %c0_i32_19 = arith.constant 0 : i32
    %41 = arith.cmpi ne, %40, %c0_i32_19 : i32
    %42 = arith.extui %41 : i1 to i32
    %c2147483647_i32 = arith.constant 2147483647 : i32
    %c0_i32_20 = arith.constant 0 : i32
    %43 = arith.cmpi ne, %42, %c0_i32_20 : i32
    scf.if %43 {
      %50 = tpu.iota {dimensions = array<i32: 0>} : vector<16x1xi32>
      %c-1640531527_i32 = arith.constant -1640531527 : i32
      %51 = vector.broadcast %c-1640531527_i32 : i32 to vector<16x1xi32>
      %52 = arith.muli %50, %51 : vector<16x1xi32>
      %c-2048144789_i32 = arith.constant -2048144789 : i32
      %53 = vector.broadcast %c-2048144789_i32 : i32 to vector<1x1024xi32>
      %54 = arith.muli %15, %53 : vector<1x1024xi32>
      %55 = vector.broadcast %52 : vector<16x1xi32> to vector<16x1024xi32>
      %56 = vector.broadcast %54 : vector<1x1024xi32> to vector<16x1024xi32>
      %57 = arith.addi %55, %56 : vector<16x1024xi32>
      %c0_25 = arith.constant 0 : index
      %58 = memref.load %arg2[%c0_25] : memref<2xi32, #tpu.memory_space<smem>>
      %59 = vector.broadcast %58 : i32 to vector<16x1024xi32>
      %60 = arith.addi %57, %59 : vector<16x1024xi32>
      %c16_i32 = arith.constant 16 : i32
      %61 = vector.broadcast %c16_i32 : i32 to vector<16x1024xi32>
      %62 = arith.shrsi %60, %61 : vector<16x1024xi32>
      %c65535_i32 = arith.constant 65535 : i32
      %63 = vector.broadcast %c65535_i32 : i32 to vector<16x1024xi32>
      %64 = arith.andi %62, %63 : vector<16x1024xi32>
      %65 = arith.xori %60, %64 : vector<16x1024xi32>
      %c2146121005_i32 = arith.constant 2146121005 : i32
      %66 = vector.broadcast %c2146121005_i32 : i32 to vector<16x1024xi32>
      %67 = arith.muli %65, %66 : vector<16x1024xi32>
      %c15_i32 = arith.constant 15 : i32
      %68 = vector.broadcast %c15_i32 : i32 to vector<16x1024xi32>
      %69 = arith.shrsi %67, %68 : vector<16x1024xi32>
      %c131071_i32 = arith.constant 131071 : i32
      %70 = vector.broadcast %c131071_i32 : i32 to vector<16x1024xi32>
      %71 = arith.andi %69, %70 : vector<16x1024xi32>
      %72 = arith.xori %67, %71 : vector<16x1024xi32>
      %c-2073254261_i32 = arith.constant -2073254261 : i32
      %73 = vector.broadcast %c-2073254261_i32 : i32 to vector<16x1024xi32>
      %74 = arith.muli %72, %73 : vector<16x1024xi32>
      %c16_i32_26 = arith.constant 16 : i32
      %75 = vector.broadcast %c16_i32_26 : i32 to vector<16x1024xi32>
      %76 = arith.shrsi %74, %75 : vector<16x1024xi32>
      %c65535_i32_27 = arith.constant 65535 : i32
      %77 = vector.broadcast %c65535_i32_27 : i32 to vector<16x1024xi32>
      %78 = arith.andi %76, %77 : vector<16x1024xi32>
      %79 = arith.xori %74, %78 : vector<16x1024xi32>
      %c16777215_i32 = arith.constant 16777215 : i32
      %80 = vector.broadcast %c16777215_i32 : i32 to vector<16x1024xi32>
      %81 = arith.andi %79, %80 : vector<16x1024xi32>
      %82 = arith.sitofp %81 : vector<16x1024xi32> to vector<16x1024xf32>
      %cst_28 = arith.constant 5.000000e-01 : f32
      %83 = vector.broadcast %cst_28 : f32 to vector<16x1024xf32>
      %84 = arith.addf %82, %83 : vector<16x1024xf32>
      %cst_29 = arith.constant 5.96046448E-8 : f32
      %85 = vector.broadcast %cst_29 : f32 to vector<16x1024xf32>
      %86 = arith.mulf %84, %85 : vector<16x1024xf32>
      %87 = math.log %86 : vector<16x1024xf32>
      %cst_30 = arith.constant 0.000000e+00 : f32
      %88 = vector.broadcast %cst_30 : f32 to vector<16x1024xf32>
      %89 = arith.subf %88, %87 : vector<16x1024xf32>
      %90 = math.log %89 : vector<16x1024xf32>
      %cst_31 = arith.constant 0.000000e+00 : f32
      %91 = vector.broadcast %cst_31 : f32 to vector<16x1024xf32>
      %92 = arith.subf %91, %90 : vector<16x1024xf32>
      %c0_32 = arith.constant 0 : index
      %c0_33 = arith.constant 0 : index
      %93 = vector.load %arg6[%c0_32, %c0_33] : memref<16x1xf32, #tpu.memory_space<vmem>>, vector<16x1xf32>
      %cst_34 = arith.constant 1.000000e+00 : f32
      %94 = vector.broadcast %cst_34 : f32 to vector<16x1xf32>
      %95 = arith.subf %94, %93 : vector<16x1xf32>
      %96 = vector.broadcast %95 : vector<16x1xf32> to vector<16x1024xf32>
      %97 = arith.mulf %92, %96 : vector<16x1024xf32>
      %98 = arith.addf %21, %97 : vector<16x1024xf32>
      %cst_35 = arith.constant dense<0xFF800000> : vector<16xf32>
      %99 = vector.multi_reduction <maximumf>, %98, %cst_35 [1] : vector<16x1024xf32> to vector<16xf32>
      %100 = vector.shape_cast %99 : vector<16xf32> to vector<16x1xf32>
      %101 = vector.broadcast %100 : vector<16x1xf32> to vector<16x1024xf32>
      %102 = arith.cmpf oeq, %98, %101 : vector<16x1024xf32>
      %103 = vector.shape_cast %15 : vector<1x1024xi32> to vector<1x1024xi32>
      %104 = vector.broadcast %103 : vector<1x1024xi32> to vector<16x1024xi32>
      %105 = vector.broadcast %c2147483647_i32 : i32 to vector<16x1024xi32>
      %106 = arith.select %102, %104, %105 : vector<16x1024xi1>, vector<16x1024xi32>
      %cst_36 = arith.constant dense<2147483647> : vector<16xi32>
      %107 = vector.multi_reduction <minsi>, %106, %cst_36 [1] : vector<16x1024xi32> to vector<16xi32>
      %108 = vector.shape_cast %107 : vector<16xi32> to vector<16x1xi32>
      %cst_37 = arith.constant 0xFF800000 : f32
      %109 = vector.broadcast %cst_37 : f32 to vector<16x1024xf32>
      %110 = arith.select %102, %21, %109 : vector<16x1024xi1>, vector<16x1024xf32>
      %cst_38 = arith.constant dense<0xFF800000> : vector<16xf32>
      %111 = vector.multi_reduction <maximumf>, %110, %cst_38 [1] : vector<16x1024xf32> to vector<16xf32>
      %112 = vector.shape_cast %111 : vector<16xf32> to vector<16x1xf32>
      %c0_39 = arith.constant 0 : index
      %c0_40 = arith.constant 0 : index
      %113 = vector.load %arg13[%c0_39, %c0_40] : memref<16x1xf32, #tpu.memory_space<vmem>>, vector<16x1xf32>
      %114 = arith.cmpf ogt, %100, %113 : vector<16x1xf32>
      %c0_41 = arith.constant 0 : index
      %c0_42 = arith.constant 0 : index
      %115 = vector.load %arg13[%c0_41, %c0_42] : memref<16x1xf32, #tpu.memory_space<vmem>>, vector<16x1xf32>
      %116 = arith.select %114, %100, %115 : vector<16x1xi1>, vector<16x1xf32>
      %c0_43 = arith.constant 0 : index
      %c0_44 = arith.constant 0 : index
      %117 = vector.load %arg13[%c0_43, %c0_44] : memref<16x1xf32, #tpu.memory_space<vmem>>, vector<16x1xf32>
      tpu.vector_store %arg13[%c0_43, %c0_44], %116 {strides = array<i32>} : memref<16x1xf32, #tpu.memory_space<vmem>>, vector<16x1xf32>,
      %c0_45 = arith.constant 0 : index
      %c0_46 = arith.constant 0 : index
      %118 = vector.load %arg14[%c0_45, %c0_46] : memref<16x1xi32, #tpu.memory_space<vmem>>, vector<16x1xi32>
      %119 = arith.select %114, %108, %118 : vector<16x1xi1>, vector<16x1xi32>
      %c0_47 = arith.constant 0 : index
      %c0_48 = arith.constant 0 : index
      %120 = vector.load %arg14[%c0_47, %c0_48] : memref<16x1xi32, #tpu.memory_space<vmem>>, vector<16x1xi32>
      tpu.vector_store %arg14[%c0_47, %c0_48], %119 {strides = array<i32>} : memref<16x1xi32, #tpu.memory_space<vmem>>, vector<16x1xi32>,
      %c0_49 = arith.constant 0 : index
      %c0_50 = arith.constant 0 : index
      %121 = vector.load %arg15[%c0_49, %c0_50] : memref<16x1xf32, #tpu.memory_space<vmem>>, vector<16x1xf32>
      %122 = arith.select %114, %112, %121 : vector<16x1xi1>, vector<16x1xf32>
      %c0_51 = arith.constant 0 : index
      %c0_52 = arith.constant 0 : index
      %123 = vector.load %arg15[%c0_51, %c0_52] : memref<16x1xf32, #tpu.memory_space<vmem>>, vector<16x1xf32>
      tpu.vector_store %arg15[%c0_51, %c0_52], %122 {strides = array<i32>} : memref<16x1xf32, #tpu.memory_space<vmem>>, vector<16x1xf32>,
    } else {
    }
    %true = arith.constant true
    %44 = arith.xori %41, %true : i1
    %45 = arith.extui %44 : i1 to i32
    %c2147483647_i32_21 = arith.constant 2147483647 : i32
    %c0_i32_22 = arith.constant 0 : i32
    %46 = arith.cmpi ne, %45, %c0_i32_22 : i32
    scf.if %46 {
      %cst_25 = arith.constant dense<0xFF800000> : vector<16xf32>
      %50 = vector.multi_reduction <maximumf>, %21, %cst_25 [1] : vector<16x1024xf32> to vector<16xf32>
      %51 = vector.shape_cast %50 : vector<16xf32> to vector<16x1xf32>
      %52 = vector.broadcast %51 : vector<16x1xf32> to vector<16x1024xf32>
      %53 = arith.cmpf oeq, %21, %52 : vector<16x1024xf32>
      %54 = vector.shape_cast %15 : vector<1x1024xi32> to vector<1x1024xi32>
      %55 = vector.broadcast %54 : vector<1x1024xi32> to vector<16x1024xi32>
      %56 = vector.broadcast %c2147483647_i32_21 : i32 to vector<16x1024xi32>
      %57 = arith.select %53, %55, %56 : vector<16x1024xi1>, vector<16x1024xi32>
      %cst_26 = arith.constant dense<2147483647> : vector<16xi32>
      %58 = vector.multi_reduction <minsi>, %57, %cst_26 [1] : vector<16x1024xi32> to vector<16xi32>
      %59 = vector.shape_cast %58 : vector<16xi32> to vector<16x1xi32>
      %cst_27 = arith.constant 0xFF800000 : f32
      %60 = vector.broadcast %cst_27 : f32 to vector<16x1024xf32>
      %61 = arith.select %53, %21, %60 : vector<16x1024xi1>, vector<16x1024xf32>
      %cst_28 = arith.constant dense<0xFF800000> : vector<16xf32>
      %62 = vector.multi_reduction <maximumf>, %61, %cst_28 [1] : vector<16x1024xf32> to vector<16xf32>
      %63 = vector.shape_cast %62 : vector<16xf32> to vector<16x1xf32>
      %c0_29 = arith.constant 0 : index
      %c0_30 = arith.constant 0 : index
      %64 = vector.load %arg13[%c0_29, %c0_30] : memref<16x1xf32, #tpu.memory_space<vmem>>, vector<16x1xf32>
      %65 = arith.cmpf ogt, %51, %64 : vector<16x1xf32>
      %c0_31 = arith.constant 0 : index
      %c0_32 = arith.constant 0 : index
      %66 = vector.load %arg13[%c0_31, %c0_32] : memref<16x1xf32, #tpu.memory_space<vmem>>, vector<16x1xf32>
      %67 = arith.select %65, %51, %66 : vector<16x1xi1>, vector<16x1xf32>
      %c0_33 = arith.constant 0 : index
      %c0_34 = arith.constant 0 : index
      %68 = vector.load %arg13[%c0_33, %c0_34] : memref<16x1xf32, #tpu.memory_space<vmem>>, vector<16x1xf32>
      tpu.vector_store %arg13[%c0_33, %c0_34], %67 {strides = array<i32>} : memref<16x1xf32, #tpu.memory_space<vmem>>, vector<16x1xf32>,
      %c0_35 = arith.constant 0 : index
      %c0_36 = arith.constant 0 : index
      %69 = vector.load %arg14[%c0_35, %c0_36] : memref<16x1xi32, #tpu.memory_space<vmem>>, vector<16x1xi32>
      %70 = arith.select %65, %59, %69 : vector<16x1xi1>, vector<16x1xi32>
      %c0_37 = arith.constant 0 : index
      %c0_38 = arith.constant 0 : index
      %71 = vector.load %arg14[%c0_37, %c0_38] : memref<16x1xi32, #tpu.memory_space<vmem>>, vector<16x1xi32>
      tpu.vector_store %arg14[%c0_37, %c0_38], %70 {strides = array<i32>} : memref<16x1xi32, #tpu.memory_space<vmem>>, vector<16x1xi32>,
      %c0_39 = arith.constant 0 : index
      %c0_40 = arith.constant 0 : index
      %72 = vector.load %arg15[%c0_39, %c0_40] : memref<16x1xf32, #tpu.memory_space<vmem>>, vector<16x1xf32>
      %73 = arith.select %65, %63, %72 : vector<16x1xi1>, vector<16x1xf32>
      %c0_41 = arith.constant 0 : index
      %c0_42 = arith.constant 0 : index
      %74 = vector.load %arg15[%c0_41, %c0_42] : memref<16x1xf32, #tpu.memory_space<vmem>>, vector<16x1xf32>
      tpu.vector_store %arg15[%c0_41, %c0_42], %73 {strides = array<i32>} : memref<16x1xf32, #tpu.memory_space<vmem>>, vector<16x1xf32>,
    } else {
    }
    %c0_i32_23 = arith.constant 0 : i32
    %47 = arith.cmpi eq, %arg1, %c0_i32_23 : i32
    %48 = arith.extui %47 : i1 to i32
    %c0_i32_24 = arith.constant 0 : i32
    %49 = arith.cmpi ne, %48, %c0_i32_24 : i32
    scf.if %49 {
      %c0_25 = arith.constant 0 : index
      %c0_26 = arith.constant 0 : index
      %50 = vector.load %arg12[%c0_25, %c0_26] : memref<16x1xf32, #tpu.memory_space<vmem>>, vector<16x1xf32>
      %cst_27 = arith.constant 0.000000e+00 : f32
      %51 = vector.broadcast %cst_27 : f32 to vector<16x1xf32>
      %52 = arith.cmpf ogt, %50, %51 : vector<16x1xf32>
      %c0_28 = arith.constant 0 : index
      %c0_29 = arith.constant 0 : index
      %53 = vector.load %arg11[%c0_28, %c0_29] : memref<16x1xf32, #tpu.memory_space<vmem>>, vector<16x1xf32>
      %54 = math.log %50 : vector<16x1xf32>
      %55 = arith.addf %53, %54 : vector<16x1xf32>
      %cst_30 = arith.constant 0xFF800000 : f32
      %56 = vector.broadcast %cst_30 : f32 to vector<16x1xf32>
      %57 = arith.select %52, %55, %56 : vector<16x1xi1>, vector<16x1xf32>
      %c0_31 = arith.constant 0 : index
      %c0_32 = arith.constant 0 : index
      %c0_33 = arith.constant 0 : index
      %58 = vector.load %arg7[%c0_31, %c0_32, %c0_33] : memref<1x16x1xf32, #tpu.memory_space<vmem>>, vector<1x16x1xf32>
      %59 = vector.shape_cast %58 : vector<1x16x1xf32> to vector<16x1xf32>
      %60 = vector.shape_cast %57 : vector<16x1xf32> to vector<1x16x1xf32>
      tpu.vector_store %arg7[%c0_31, %c0_32, %c0_33], %60 {strides = array<i32>} : memref<1x16x1xf32, #tpu.memory_space<vmem>>, vector<1x16x1xf32>,
      %c0_34 = arith.constant 0 : index
      %c0_35 = arith.constant 0 : index
      %61 = vector.load %arg13[%c0_34, %c0_35] : memref<16x1xf32, #tpu.memory_space<vmem>>, vector<16x1xf32>
      %c0_36 = arith.constant 0 : index
      %c0_37 = arith.constant 0 : index
      %c0_38 = arith.constant 0 : index
      %62 = vector.load %arg8[%c0_36, %c0_37, %c0_38] : memref<1x16x1xf32, #tpu.memory_space<vmem>>, vector<1x16x1xf32>
      %63 = vector.shape_cast %62 : vector<1x16x1xf32> to vector<16x1xf32>
      %64 = vector.shape_cast %61 : vector<16x1xf32> to vector<1x16x1xf32>
      tpu.vector_store %arg8[%c0_36, %c0_37, %c0_38], %64 {strides = array<i32>} : memref<1x16x1xf32, #tpu.memory_space<vmem>>, vector<1x16x1xf32>,
      %c0_39 = arith.constant 0 : index
      %c0_40 = arith.constant 0 : index
      %65 = vector.load %arg14[%c0_39, %c0_40] : memref<16x1xi32, #tpu.memory_space<vmem>>, vector<16x1xi32>
      %c0_41 = arith.constant 0 : index
      %c0_42 = arith.constant 0 : index
      %c0_43 = arith.constant 0 : index
      %66 = vector.load %arg9[%c0_41, %c0_42, %c0_43] : memref<1x16x1xi32, #tpu.memory_space<vmem>>, vector<1x16x1xi32>
      %67 = vector.shape_cast %66 : vector<1x16x1xi32> to vector<16x1xi32>
      %68 = vector.shape_cast %65 : vector<16x1xi32> to vector<1x16x1xi32>
      tpu.vector_store %arg9[%c0_41, %c0_42, %c0_43], %68 {strides = array<i32>} : memref<1x16x1xi32, #tpu.memory_space<vmem>>, vector<1x16x1xi32>,
      %c0_44 = arith.constant 0 : index
      %c0_45 = arith.constant 0 : index
      %69 = vector.load %arg15[%c0_44, %c0_45] : memref<16x1xf32, #tpu.memory_space<vmem>>, vector<16x1xf32>
      %c0_46 = arith.constant 0 : index
      %c0_47 = arith.constant 0 : index
      %c0_48 = arith.constant 0 : index
      %70 = vector.load %arg10[%c0_46, %c0_47, %c0_48] : memref<1x16x1xf32, #tpu.memory_space<vmem>>, vector<1x16x1xf32>
      %71 = vector.shape_cast %70 : vector<1x16x1xf32> to vector<16x1xf32>
      %72 = vector.shape_cast %69 : vector<16x1xf32> to vector<1x16x1xf32>
      tpu.vector_store %arg10[%c0_46, %c0_47, %c0_48], %72 {strides = array<i32>} : memref<1x16x1xf32, #tpu.memory_space<vmem>>, vector<1x16x1xf32>,
    } else {
    }
    return
  }
  func.func @transform_0(%arg0: i32, %arg1: i32, %arg2: memref<2xi32, #tpu.memory_space<smem>>) -> (i32, i32) {
    %c0_i32 = arith.constant 0 : i32
    %c0_i32_0 = arith.constant 0 : i32
    %c0_i32_1 = arith.constant 0 : i32
    return %c0_i32, %c0_i32_0 : i32, i32
  }
  func.func @transform_1(%arg0: i32, %arg1: i32, %arg2: memref<2xi32, #tpu.memory_space<smem>>) -> (i32, i32, i32) {
    %c1_i32 = arith.constant 1 : i32
    %0 = arith.muli %arg0, %c1_i32 : i32
    %1 = arith.addi %0, %arg1 : i32
    %c0_i32 = arith.constant 0 : i32
    %2 = arith.minsi %1, %c0_i32 : i32
    %c0_i32_0 = arith.constant 0 : i32
    %c0_i32_1 = arith.constant 0 : i32
    %c0_i32_2 = arith.constant 0 : i32
    return %2, %c0_i32_0, %c0_i32_1 : i32, i32, i32
  }
  func.func @transform_2(%arg0: i32, %arg1: i32, %arg2: memref<2xi32, #tpu.memory_space<smem>>) -> (i32, i32) {
    %c0_i32 = arith.constant 0 : i32
    %c0_i32_0 = arith.constant 0 : i32
    %c0_i32_1 = arith.constant 0 : i32
    return %c0_i32, %c0_i32_0 : i32, i32
  }
  func.func @transform_3(%arg0: i32, %arg1: i32, %arg2: memref<2xi32, #tpu.memory_space<smem>>) -> (i32, i32) {
    %c0_i32 = arith.constant 0 : i32
    %c0_i32_0 = arith.constant 0 : i32
    %c0_i32_1 = arith.constant 0 : i32
    return %c0_i32, %c0_i32_0 : i32, i32
  }
  func.func @transform_4(%arg0: i32, %arg1: i32, %arg2: memref<2xi32, #tpu.memory_space<smem>>) -> (i32, i32, i32) {
    %c0_i32 = arith.constant 0 : i32
    %c0_i32_0 = arith.constant 0 : i32
    %c0_i32_1 = arith.constant 0 : i32
    return %arg0, %c0_i32, %c0_i32_0 : i32, i32, i32
  }
  func.func @transform_5(%arg0: i32, %arg1: i32, %arg2: memref<2xi32, #tpu.memory_space<smem>>) -> (i32, i32, i32) {
    %c0_i32 = arith.constant 0 : i32
    %c0_i32_0 = arith.constant 0 : i32
    %c0_i32_1 = arith.constant 0 : i32
    return %arg0, %c0_i32, %c0_i32_0 : i32, i32, i32
  }
  func.func @transform_6(%arg0: i32, %arg1: i32, %arg2: memref<2xi32, #tpu.memory_space<smem>>) -> (i32, i32, i32) {
    %c0_i32 = arith.constant 0 : i32
    %c0_i32_0 = arith.constant 0 : i32
    %c0_i32_1 = arith.constant 0 : i32
    return %arg0, %c0_i32, %c0_i32_0 : i32, i32, i32
  }
  func.func @transform_7(%arg0: i32, %arg1: i32, %arg2: memref<2xi32, #tpu.memory_space<smem>>) -> (i32, i32, i32) {
    %c0_i32 = arith.constant 0 : i32
    %c0_i32_0 = arith.constant 0 : i32
    %c0_i32_1 = arith.constant 0 : i32
    return %arg0, %c0_i32, %c0_i32_0 : i32, i32, i32
  }
}

</mosaic_0001>

<llo_original>
// kernel: _logits_processor_pallas.1
$region0: #{_logits_processor_pallas.1}
  #allocation0 [shape = 'u32[]', space=smem, size = 0x4, offset = 0x4, fixed_abs, tag = 'smem constant byte address 0x4 - core index']
  #allocation1 [shape = 'u32[72,128]{1,0:T(1,128)}', space=vmem, size = 0x9000, scoped, tag = 'internal scratch']
  #allocation2 [shape = 'f32[16,1]{1,0:T(8,128)}', space=vmem, size = 0x2000, scoped, tag = 'scratch operand']
  #allocation3 [shape = 'f32[16,1]{1,0:T(8,128)}', space=vmem, size = 0x2000, scoped, tag = 'scratch operand']
  #allocation4 [shape = 'f32[16,1]{1,0:T(8,128)}', space=vmem, size = 0x2000, scoped, tag = 'scratch operand']
  #allocation5 [shape = 's32[16,1]{1,0:T(8,128)}', space=vmem, size = 0x2000, scoped, tag = 'scratch operand']
  #allocation6 [shape = 'f32[16,1]{1,0:T(8,128)}', space=vmem, size = 0x2000, scoped, tag = 'scratch operand']
  #allocation7 [shape = 's32[1]{0}', space=sflag, size = 0x4, scoped, tag = 'scoped memory for _logits_processor_pallas.1']
  #allocation8 [shape = 'u8[512]{0}', space=smem, size = 0x200, scoped, tag = 'prefetched SMEM operand 0']
  %s0 = inlined_call_operand.vmem [shape: s32[2], index: 0, kind: input, shape index: {}]
  %s1 = inlined_call_operand.vmem [shape: bf16[16,256], index: 1, kind: input, shape index: {}]
  %s2 = inlined_call_operand.hbm [shape: bf16[1,256,1024], index: 2, kind: input, shape index: {}]
  %s3 = inlined_call_operand.vmem [shape: f32[16,1], index: 3, kind: input, shape index: {}]
  %s4 = inlined_call_operand.vmem [shape: f32[16,1], index: 4, kind: input, shape index: {}]
  %s5 = inlined_call_operand.vmem [shape: f32[1,16,1], index: 5, kind: output, shape index: {0}]
  %s6 = inlined_call_operand.hbm [shape: f32[1,16,1], index: 6, kind: output, shape index: {1}]
  %s7 = inlined_call_operand.vmem [shape: s32[1,16,1], index: 7, kind: output, shape index: {2}]
  %s8 = inlined_call_operand.vmem [shape: f32[1,16,1], index: 8, kind: output, shape index: {3}]
  %9 = xla_tuple %s5, %s6, %s7, %s8
  %s10 = sld [smem:[#allocation0]]
  $region70: #{_logits_processor_pallas.1} parent=0
    _
  %s12 = ssub.s32 1, %s10
  %s13 = scalar_select 0, %s12, %s10
  %s15 = sshll.u32 %s0, 4
  %s16 = int_to_ptr.vmem [resolvable:$true] %s15
  %18 = dma.vmem_to_smem %s16, 16, [#allocation8], [#allocation7]
  %20 = dma.done [#allocation7], 16
  %21 = sfence
  $region1: #{_logits_processor_pallas.1} parent=0
    #allocation9 [shape = 'u8[524288]{0}', space=vmem, size = 0x80000, scoped, tag = 'input window, operand 2, single buffered']
    #allocation10 [shape = 's32[1]{0}', space=sflag, size = 0x4, scoped, tag = 'scoped memory for _logits_processor_pallas.1']
    #allocation11 [shape = 's32[1]{0}', space=sflag, size = 0x4, scoped, tag = 'scoped memory for _logits_processor_pallas.1']
    #allocation12 [shape = 'u8[8192]{0}', space=vmem, size = 0x2000, scoped, tag = 'output window, operand 1, single buffered']
    %22 = vsyncpa [#allocation10], 0
    %23 = vsyncpa [#allocation11], 0
    // Predicated region
    $region2: #{_logits_processor_pallas.1} parent=1 // pred_check
      _
    $region3: #{_logits_processor_pallas.1} parent=1 // pred_check_branch
      %25 = sbr.rel (0) target = $region5
    $region4: #{_logits_processor_pallas.1} parent=1 // pred_region
      _
    $region5: #{_logits_processor_pallas.1} parent=1 // pred_fallthru
      _
    // Predicated region
    $region6: #{_logits_processor_pallas.1} parent=1 // pred_check
      _
    $region7: #{_logits_processor_pallas.1} parent=1 // pred_check_branch
      %27 = sbr.rel (0) target = $region9
    $region8: #{_logits_processor_pallas.1} parent=1 // pred_region
      %s28 = sadd.s32 0, 0
      %p29 = scmp.lt.s32.totalorder %s28, 0
      %s30 = scalar_select %p29, %s28, 0
      %32 = vsyncadd [#allocation10], 0
      %s33 = smul.addr %s30, 256
      %s34 = smul.addr %s33, 4
      %s35 = scalar_lea.hbm %s2, %s34
      %s36 = sshll.u32 %s35, 4
      %s37 = int_to_ptr.hbm [resolvable:$true] %s36
      %s38 = sshll.u32 [#allocation9], 4
      %s39 = int_to_ptr.vmem [resolvable:$true] %s38
      %44 = dma.hbm_to_vmem [thread:$0]  %s37, 16384, %s39, [#allocation10], 512, 512, 32
    $region9: #{_logits_processor_pallas.1} parent=1 // pred_fallthru
      _
    // Predicated region
    $region10: #{_logits_processor_pallas.1} parent=1 // pred_check
      _
    $region11: #{_logits_processor_pallas.1} parent=1 // pred_check_branch
      %46 = sbr.rel (0) target = $region13
    $region12: #{_logits_processor_pallas.1} parent=1 // pred_region
      _
    $region13: #{_logits_processor_pallas.1} parent=1 // pred_fallthru
      _
    // Predicated region
    $region14: #{_logits_processor_pallas.1} parent=1 // pred_check
      _
    $region15: #{_logits_processor_pallas.1} parent=1 // pred_check_branch
      %48 = sbr.rel (0) target = $region17
    $region16: #{_logits_processor_pallas.1} parent=1 // pred_region
      _
    $region17: #{_logits_processor_pallas.1} parent=1 // pred_fallthru
      _
    // Predicated region
    $region18: #{_logits_processor_pallas.1} parent=1 // pred_check
      _
    $region19: #{_logits_processor_pallas.1} parent=1 // pred_check_branch
      %50 = sbr.rel (0) target = $region21
    $region20: #{_logits_processor_pallas.1} parent=1 // pred_region
      %52 = dma.done [#allocation10], 16384
    $region21: #{_logits_processor_pallas.1} parent=1 // pred_fallthru
      _
    %s53 = sadd.s32 0, 0
    %p54 = scmp.lt.s32.totalorder %s53, 0
    %s55 = scalar_select %p54, %s53, 0
    %p56 = scmp.eq.s32.totalorder 0, 0
    // Predicated region
    $region22: #{_logits_processor_pallas.1} parent=1 // pred_check
      %p57 = pneg %p56
    $region23: #{_logits_processor_pallas.1} parent=1 // pred_check_branch
      %59 = sbr.rel (%p57) target = $region25
    $region24: #{_logits_processor_pallas.1} parent=1 // pred_region
      %vm60 = vcmask 7168
      %61 = vst.msk [vmem:[#allocation2] sm:$0xff] %vm60, -inf
      %62 = vst.msk [vmem:[#allocation2 + $0x8] sm:$0xff] %vm60, -inf
      %63 = vst.msk [vmem:[#allocation3] sm:$0xff] %vm60, 0.0
      %64 = vst.msk [vmem:[#allocation3 + $0x8] sm:$0xff] %vm60, 0.0
      %65 = vst.msk [vmem:[#allocation4] sm:$0xff] %vm60, -inf
      %66 = vst.msk [vmem:[#allocation4 + $0x8] sm:$0xff] %vm60, -inf
      %67 = vst.msk [vmem:[#allocation5] sm:$0xff] %vm60, 0
      %68 = vst.msk [vmem:[#allocation5 + $0x8] sm:$0xff] %vm60, 0
      %69 = vst.msk [vmem:[#allocation6] sm:$0xff] %vm60, -inf
      %70 = vst.msk [vmem:[#allocation6 + $0x8] sm:$0xff] %vm60, -inf
    $region25: #{_logits_processor_pallas.1} parent=1 // pred_fallthru
      _
    %v71 = vld [vmem:[%s1] sm:$0xff]
    %v72 = vld [vmem:[%s1 + $0x8] sm:$0xff]
    %v73 = vld [vmem:[#allocation9] sm:$0xff]
    %v74 = vld [vmem:[#allocation9 + $0x8] sm:$0xff]
    %v75 = vld [vmem:[#allocation9 + $0x10] sm:$0xff]
    %v76 = vld [vmem:[#allocation9 + $0x18] sm:$0xff]
    %v77 = vld [vmem:[#allocation9 + $0x20] sm:$0xff]
    %v78 = vld [vmem:[#allocation9 + $0x28] sm:$0xff]
    %v79 = vld [vmem:[#allocation9 + $0x30] sm:$0xff]
    %v80 = vld [vmem:[#allocation9 + $0x38] sm:$0xff]
    %v81 = vld [vmem:[#allocation9 + $0x40] sm:$0xff]
    %v82 = vld [vmem:[#allocation9 + $0x48] sm:$0xff]
    %v83 = vld [vmem:[#allocation9 + $0x50] sm:$0xff]
    %v84 = vld [vmem:[#allocation9 + $0x58] sm:$0xff]
    %v85 = vld [vmem:[#allocation9 + $0x60] sm:$0xff]
    %v86 = vld [vmem:[#allocation9 + $0x68] sm:$0xff]
    %v87 = vld [vmem:[#allocation9 + $0x70] sm:$0xff]
    %v88 = vld [vmem:[#allocation9 + $0x78] sm:$0xff]
    %v89 = vld [vmem:[#allocation9 + $0x80] sm:$0xff]
    %v90 = vld [vmem:[#allocation9 + $0x88] sm:$0xff]
    %v91 = vld [vmem:[#allocation9 + $0x90] sm:$0xff]
    %v92 = vld [vmem:[#allocation9 + $0x98] sm:$0xff]
    %v93 = vld [vmem:[#allocation9 + $0xa0] sm:$0xff]
    %v94 = vld [vmem:[#allocation9 + $0xa8] sm:$0xff]
    %v95 = vld [vmem:[#allocation9 + $0xb0] sm:$0xff]
    %v96 = vld [vmem:[#allocation9 + $0xb8] sm:$0xff]
    %v97 = vld [vmem:[#allocation9 + $0xc0] sm:$0xff]
    %v98 = vld [vmem:[#allocation9 + $0xc8] sm:$0xff]
    %v99 = vld [vmem:[#allocation9 + $0xd0] sm:$0xff]
    %v100 = vld [vmem:[#allocation9 + $0xd8] sm:$0xff]
    %v101 = vld [vmem:[#allocation9 + $0xe0] sm:$0xff]
    %v102 = vld [vmem:[#allocation9 + $0xe8] sm:$0xff]
    %v103 = vld [vmem:[#allocation9 + $0xf0] sm:$0xff]
    %v104 = vld [vmem:[#allocation9 + $0xf8] sm:$0xff]
    %v105 = vld [vmem:[#allocation9 + $0x100] sm:$0xff]
    %v106 = vld [vmem:[#allocation9 + $0x108] sm:$0xff]
    %v107 = vld [vmem:[#allocation9 + $0x110] sm:$0xff]
    %v108 = vld [vmem:[#allocation9 + $0x118] sm:$0xff]
    %v109 = vld [vmem:[#allocation9 + $0x120] sm:$0xff]
    %v110 = vld [vmem:[#allocation9 + $0x128] sm:$0xff]
    %v111 = vld [vmem:[#allocation9 + $0x130] sm:$0xff]
    %v112 = vld [vmem:[#allocation9 + $0x138] sm:$0xff]
    %v113 = vld [vmem:[#allocation9 + $0x140] sm:$0xff]
    %v114 = vld [vmem:[#allocation9 + $0x148] sm:$0xff]
    %v115 = vld [vmem:[#allocation9 + $0x150] sm:$0xff]
    %v116 = vld [vmem:[#allocation9 + $0x158] sm:$0xff]
    %v117 = vld [vmem:[#allocation9 + $0x160] sm:$0xff]
    %v118 = vld [vmem:[#allocation9 + $0x168] sm:$0xff]
    %v119 = vld [vmem:[#allocation9 + $0x170] sm:$0xff]
    %v120 = vld [vmem:[#allocation9 + $0x178] sm:$0xff]
    %v121 = vld [vmem:[#allocation9 + $0x180] sm:$0xff]
    %v122 = vld [vmem:[#allocation9 + $0x188] sm:$0xff]
    %v123 = vld [vmem:[#allocation9 + $0x190] sm:$0xff]
    %v124 = vld [vmem:[#allocation9 + $0x198] sm:$0xff]
    %v125 = vld [vmem:[#allocation9 + $0x1a0] sm:$0xff]
    %v126 = vld [vmem:[#allocation9 + $0x1a8] sm:$0xff]
    %v127 = vld [vmem:[#allocation9 + $0x1b0] sm:$0xff]
    %v128 = vld [vmem:[#allocation9 + $0x1b8] sm:$0xff]
    %v129 = vld [vmem:[#allocation9 + $0x1c0] sm:$0xff]
    %v130 = vld [vmem:[#allocation9 + $0x1c8] sm:$0xff]
    %v131 = vld [vmem:[#allocation9 + $0x1d0] sm:$0xff]
    %v132 = vld [vmem:[#allocation9 + $0x1d8] sm:$0xff]
    %v133 = vld [vmem:[#allocation9 + $0x1e0] sm:$0xff]
    %v134 = vld [vmem:[#allocation9 + $0x1e8] sm:$0xff]
    %v135 = vld [vmem:[#allocation9 + $0x1f0] sm:$0xff]
    %v136 = vld [vmem:[#allocation9 + $0x1f8] sm:$0xff]
    %v137 = vld [vmem:[#allocation9 + $0x200] sm:$0xff]
    %v138 = vld [vmem:[#allocation9 + $0x208] sm:$0xff]
    %v139 = vld [vmem:[#allocation9 + $0x210] sm:$0xff]
    %v140 = vld [vmem:[#allocation9 + $0x218] sm:$0xff]
    %v141 = vld [vmem:[#allocation9 + $0x220] sm:$0xff]
    %v142 = vld [vmem:[#allocation9 + $0x228] sm:$0xff]
    %v143 = vld [vmem:[#allocation9 + $0x230] sm:$0xff]
    %v144 = vld [vmem:[#allocation9 + $0x238] sm:$0xff]
    %v145 = vld [vmem:[#allocation9 + $0x240] sm:$0xff]
    %v146 = vld [vmem:[#allocation9 + $0x248] sm:$0xff]
    %v147 = vld [vmem:[#allocation9 + $0x250] sm:$0xff]
    %v148 = vld [vmem:[#allocation9 + $0x258] sm:$0xff]
    %v149 = vld [vmem:[#allocation9 + $0x260] sm:$0xff]
    %v150 = vld [vmem:[#allocation9 + $0x268] sm:$0xff]
    %v151 = vld [vmem:[#allocation9 + $0x270] sm:$0xff]
    %v152 = vld [vmem:[#allocation9 + $0x278] sm:$0xff]
    %v153 = vld [vmem:[#allocation9 + $0x280] sm:$0xff]
    %v154 = vld [vmem:[#allocation9 + $0x288] sm:$0xff]
    %v155 = vld [vmem:[#allocation9 + $0x290] sm:$0xff]
    %v156 = vld [vmem:[#allocation9 + $0x298] sm:$0xff]
    %v157 = vld [vmem:[#allocation9 + $0x2a0] sm:$0xff]
    %v158 = vld [vmem:[#allocation9 + $0x2a8] sm:$0xff]
    %v159 = vld [vmem:[#allocation9 + $0x2b0] sm:$0xff]
    %v160 = vld [vmem:[#allocation9 + $0x2b8] sm:$0xff]
    %v161 = vld [vmem:[#allocation9 + $0x2c0] sm:$0xff]
    %v162 = vld [vmem:[#allocation9 + $0x2c8] sm:$0xff]
    %v163 = vld [vmem:[#allocation9 + $0x2d0] sm:$0xff]
    %v164 = vld [vmem:[#allocation9 + $0x2d8] sm:$0xff]
    %v165 = vld [vmem:[#allocation9 + $0x2e0] sm:$0xff]
    %v166 = vld [vmem:[#allocation9 + $0x2e8] sm:$0xff]
    %v167 = vld [vmem:[#allocation9 + $0x2f0] sm:$0xff]
    %v168 = vld [vmem:[#allocation9 + $0x2f8] sm:$0xff]
    %v169 = vld [vmem:[#allocation9 + $0x300] sm:$0xff]
    %v170 = vld [vmem:[#allocation9 + $0x308] sm:$0xff]
    %v171 = vld [vmem:[#allocation9 + $0x310] sm:$0xff]
    %v172 = vld [vmem:[#allocation9 + $0x318] sm:$0xff]
    %v173 = vld [vmem:[#allocation9 + $0x320] sm:$0xff]
    %v174 = vld [vmem:[#allocation9 + $0x328] sm:$0xff]
    %v175 = vld [vmem:[#allocation9 + $0x330] sm:$0xff]
    %v176 = vld [vmem:[#allocation9 + $0x338] sm:$0xff]
    %v177 = vld [vmem:[#allocation9 + $0x340] sm:$0xff]
    %v178 = vld [vmem:[#allocation9 + $0x348] sm:$0xff]
    %v179 = vld [vmem:[#allocation9 + $0x350] sm:$0xff]
    %v180 = vld [vmem:[#allocation9 + $0x358] sm:$0xff]
    %v181 = vld [vmem:[#allocation9 + $0x360] sm:$0xff]
    %v182 = vld [vmem:[#allocation9 + $0x368] sm:$0xff]
    %v183 = vld [vmem:[#allocation9 + $0x370] sm:$0xff]
    %v184 = vld [vmem:[#allocation9 + $0x378] sm:$0xff]
    %v185 = vld [vmem:[#allocation9 + $0x380] sm:$0xff]
    %v186 = vld [vmem:[#allocation9 + $0x388] sm:$0xff]
    %v187 = vld [vmem:[#allocation9 + $0x390] sm:$0xff]
    %v188 = vld [vmem:[#allocation9 + $0x398] sm:$0xff]
    %v189 = vld [vmem:[#allocation9 + $0x3a0] sm:$0xff]
    %v190 = vld [vmem:[#allocation9 + $0x3a8] sm:$0xff]
    %v191 = vld [vmem:[#allocation9 + $0x3b0] sm:$0xff]
    %v192 = vld [vmem:[#allocation9 + $0x3b8] sm:$0xff]
    %v193 = vld [vmem:[#allocation9 + $0x3c0] sm:$0xff]
    %v194 = vld [vmem:[#allocation9 + $0x3c8] sm:$0xff]
    %v195 = vld [vmem:[#allocation9 + $0x3d0] sm:$0xff]
    %v196 = vld [vmem:[#allocation9 + $0x3d8] sm:$0xff]
    %v197 = vld [vmem:[#allocation9 + $0x3e0] sm:$0xff]
    %v198 = vld [vmem:[#allocation9 + $0x3e8] sm:$0xff]
    %v199 = vld [vmem:[#allocation9 + $0x3f0] sm:$0xff]
    %v200 = vld [vmem:[#allocation9 + $0x3f8] sm:$0xff]
    %v203 = vunpack.c.l.b16 %v71
    %v204 = vunpack.c.h.b16 %v71
    %v205 = vunpack.c.l.b16 %v72
    %v206 = vunpack.c.h.b16 %v72
    %v207 = vpack.c.b16 %v205, %v203
    %v208 = vpack.c.b16 %v206, %v204
    %v339 = vunpack.c.l.b16 %v73
    %v340 = vunpack.c.h.b16 %v73
    %v341 = vunpack.c.l.b16 %v74
    %v342 = vunpack.c.h.b16 %v74
    %v343 = vunpack.c.l.b16 %v75
    %v344 = vunpack.c.h.b16 %v75
    %v345 = vunpack.c.l.b16 %v76
    %v346 = vunpack.c.h.b16 %v76
    %v347 = vunpack.c.l.b16 %v77
    %v348 = vunpack.c.h.b16 %v77
    %v349 = vunpack.c.l.b16 %v78
    %v350 = vunpack.c.h.b16 %v78
    %v351 = vunpack.c.l.b16 %v79
    %v352 = vunpack.c.h.b16 %v79
    %v353 = vunpack.c.l.b16 %v80
    %v354 = vunpack.c.h.b16 %v80
    %v355 = vunpack.c.l.b16 %v81
    %v356 = vunpack.c.h.b16 %v81
    %v357 = vunpack.c.l.b16 %v82
    %v358 = vunpack.c.h.b16 %v82
    %v359 = vunpack.c.l.b16 %v83
    %v360 = vunpack.c.h.b16 %v83
    %v361 = vunpack.c.l.b16 %v84
    %v362 = vunpack.c.h.b16 %v84
    %v363 = vunpack.c.l.b16 %v85
    %v364 = vunpack.c.h.b16 %v85
    %v365 = vunpack.c.l.b16 %v86
    %v366 = vunpack.c.h.b16 %v86
    %v367 = vunpack.c.l.b16 %v87
    %v368 = vunpack.c.h.b16 %v87
    %v369 = vunpack.c.l.b16 %v88
    %v370 = vunpack.c.h.b16 %v88
    %v371 = vunpack.c.l.b16 %v89
    %v372 = vunpack.c.h.b16 %v89
    %v373 = vunpack.c.l.b16 %v90
    %v374 = vunpack.c.h.b16 %v90
    %v375 = vunpack.c.l.b16 %v91
    %v376 = vunpack.c.h.b16 %v91
    %v377 = vunpack.c.l.b16 %v92
    %v378 = vunpack.c.h.b16 %v92
    %v379 = vunpack.c.l.b16 %v93
    %v380 = vunpack.c.h.b16 %v93
    %v381 = vunpack.c.l.b16 %v94
    %v382 = vunpack.c.h.b16 %v94
    %v383 = vunpack.c.l.b16 %v95
    %v384 = vunpack.c.h.b16 %v95
    %v385 = vunpack.c.l.b16 %v96
    %v386 = vunpack.c.h.b16 %v96
    %v387 = vunpack.c.l.b16 %v97
    %v388 = vunpack.c.h.b16 %v97
    %v389 = vunpack.c.l.b16 %v98
    %v390 = vunpack.c.h.b16 %v98
    %v391 = vunpack.c.l.b16 %v99
    %v392 = vunpack.c.h.b16 %v99
    %v393 = vunpack.c.l.b16 %v100
    %v394 = vunpack.c.h.b16 %v100
    %v395 = vunpack.c.l.b16 %v101
    %v396 = vunpack.c.h.b16 %v101
    %v397 = vunpack.c.l.b16 %v102
    %v398 = vunpack.c.h.b16 %v102
    %v399 = vunpack.c.l.b16 %v103
    %v400 = vunpack.c.h.b16 %v103
    %v401 = vunpack.c.l.b16 %v104
    %v402 = vunpack.c.h.b16 %v104
    %v403 = vunpack.c.l.b16 %v105
    %v404 = vunpack.c.h.b16 %v105
    %v405 = vunpack.c.l.b16 %v106
    %v406 = vunpack.c.h.b16 %v106
    %v407 = vunpack.c.l.b16 %v107
    %v408 = vunpack.c.h.b16 %v107
    %v409 = vunpack.c.l.b16 %v108
    %v410 = vunpack.c.h.b16 %v108
    %v411 = vunpack.c.l.b16 %v109
    %v412 = vunpack.c.h.b16 %v109
    %v413 = vunpack.c.l.b16 %v110
    %v414 = vunpack.c.h.b16 %v110
    %v415 = vunpack.c.l.b16 %v111
    %v416 = vunpack.c.h.b16 %v111
    %v417 = vunpack.c.l.b16 %v112
    %v418 = vunpack.c.h.b16 %v112
    %v419 = vunpack.c.l.b16 %v113
    %v420 = vunpack.c.h.b16 %v113
    %v421 = vunpack.c.l.b16 %v114
    %v422 = vunpack.c.h.b16 %v114
    %v423 = vunpack.c.l.b16 %v115
    %v424 = vunpack.c.h.b16 %v115
    %v425 = vunpack.c.l.b16 %v116
    %v426 = vunpack.c.h.b16 %v116
    %v427 = vunpack.c.l.b16 %v117
    %v428 = vunpack.c.h.b16 %v117
    %v429 = vunpack.c.l.b16 %v118
    %v430 = vunpack.c.h.b16 %v118
    %v431 = vunpack.c.l.b16 %v119
    %v432 = vunpack.c.h.b16 %v119
    %v433 = vunpack.c.l.b16 %v120
    %v434 = vunpack.c.h.b16 %v120
    %v435 = vunpack.c.l.b16 %v121
    %v436 = vunpack.c.h.b16 %v121
    %v437 = vunpack.c.l.b16 %v122
    %v438 = vunpack.c.h.b16 %v122
    %v439 = vunpack.c.l.b16 %v123
    %v440 = vunpack.c.h.b16 %v123
    %v441 = vunpack.c.l.b16 %v124
    %v442 = vunpack.c.h.b16 %v124
    %v443 = vunpack.c.l.b16 %v125
    %v444 = vunpack.c.h.b16 %v125
    %v445 = vunpack.c.l.b16 %v126
    %v446 = vunpack.c.h.b16 %v126
    %v447 = vunpack.c.l.b16 %v127
    %v448 = vunpack.c.h.b16 %v127
    %v449 = vunpack.c.l.b16 %v128
    %v450 = vunpack.c.h.b16 %v128
    %v451 = vunpack.c.l.b16 %v129
    %v452 = vunpack.c.h.b16 %v129
    %v453 = vunpack.c.l.b16 %v130
    %v454 = vunpack.c.h.b16 %v130
    %v455 = vunpack.c.l.b16 %v131
    %v456 = vunpack.c.h.b16 %v131
    %v457 = vunpack.c.l.b16 %v132
    %v458 = vunpack.c.h.b16 %v132
    %v459 = vunpack.c.l.b16 %v133
    %v460 = vunpack.c.h.b16 %v133
    %v461 = vunpack.c.l.b16 %v134
    %v462 = vunpack.c.h.b16 %v134
    %v463 = vunpack.c.l.b16 %v135
    %v464 = vunpack.c.h.b16 %v135
    %v465 = vunpack.c.l.b16 %v136
    %v466 = vunpack.c.h.b16 %v136
    %v467 = vunpack.c.l.b16 %v137
    %v468 = vunpack.c.h.b16 %v137
    %v469 = vunpack.c.l.b16 %v138
    %v470 = vunpack.c.h.b16 %v138
    %v471 = vunpack.c.l.b16 %v139
    %v472 = vunpack.c.h.b16 %v139
    %v473 = vunpack.c.l.b16 %v140
    %v474 = vunpack.c.h.b16 %v140
    %v475 = vunpack.c.l.b16 %v141
    %v476 = vunpack.c.h.b16 %v141
    %v477 = vunpack.c.l.b16 %v142
    %v478 = vunpack.c.h.b16 %v142
    %v479 = vunpack.c.l.b16 %v143
    %v480 = vunpack.c.h.b16 %v143
    %v481 = vunpack.c.l.b16 %v144
    %v482 = vunpack.c.h.b16 %v144
    %v483 = vunpack.c.l.b16 %v145
    %v484 = vunpack.c.h.b16 %v145
    %v485 = vunpack.c.l.b16 %v146
    %v486 = vunpack.c.h.b16 %v146
    %v487 = vunpack.c.l.b16 %v147
    %v488 = vunpack.c.h.b16 %v147
    %v489 = vunpack.c.l.b16 %v148
    %v490 = vunpack.c.h.b16 %v148
    %v491 = vunpack.c.l.b16 %v149
    %v492 = vunpack.c.h.b16 %v149
    %v493 = vunpack.c.l.b16 %v150
    %v494 = vunpack.c.h.b16 %v150
    %v495 = vunpack.c.l.b16 %v151
    %v496 = vunpack.c.h.b16 %v151
    %v497 = vunpack.c.l.b16 %v152
    %v498 = vunpack.c.h.b16 %v152
    %v499 = vunpack.c.l.b16 %v153
    %v500 = vunpack.c.h.b16 %v153
    %v501 = vunpack.c.l.b16 %v154
    %v502 = vunpack.c.h.b16 %v154
    %v503 = vunpack.c.l.b16 %v155
    %v504 = vunpack.c.h.b16 %v155
    %v505 = vunpack.c.l.b16 %v156
    %v506 = vunpack.c.h.b16 %v156
    %v507 = vunpack.c.l.b16 %v157
    %v508 = vunpack.c.h.b16 %v157
    %v509 = vunpack.c.l.b16 %v158
    %v510 = vunpack.c.h.b16 %v158
    %v511 = vunpack.c.l.b16 %v159
    %v512 = vunpack.c.h.b16 %v159
    %v513 = vunpack.c.l.b16 %v160
    %v514 = vunpack.c.h.b16 %v160
    %v515 = vunpack.c.l.b16 %v161
    %v516 = vunpack.c.h.b16 %v161
    %v517 = vunpack.c.l.b16 %v162
    %v518 = vunpack.c.h.b16 %v162
    %v519 = vunpack.c.l.b16 %v163
    %v520 = vunpack.c.h.b16 %v163
    %v521 = vunpack.c.l.b16 %v164
    %v522 = vunpack.c.h.b16 %v164
    %v523 = vunpack.c.l.b16 %v165
    %v524 = vunpack.c.h.b16 %v165
    %v525 = vunpack.c.l.b16 %v166
    %v526 = vunpack.c.h.b16 %v166
    %v527 = vunpack.c.l.b16 %v167
    %v528 = vunpack.c.h.b16 %v167
    %v529 = vunpack.c.l.b16 %v168
    %v530 = vunpack.c.h.b16 %v168
    %v531 = vunpack.c.l.b16 %v169
    %v532 = vunpack.c.h.b16 %v169
    %v533 = vunpack.c.l.b16 %v170
    %v534 = vunpack.c.h.b16 %v170
    %v535 = vunpack.c.l.b16 %v171
    %v536 = vunpack.c.h.b16 %v171
    %v537 = vunpack.c.l.b16 %v172
    %v538 = vunpack.c.h.b16 %v172
    %v539 = vunpack.c.l.b16 %v173
    %v540 = vunpack.c.h.b16 %v173
    %v541 = vunpack.c.l.b16 %v174
    %v542 = vunpack.c.h.b16 %v174
    %v543 = vunpack.c.l.b16 %v175
    %v544 = vunpack.c.h.b16 %v175
    %v545 = vunpack.c.l.b16 %v176
    %v546 = vunpack.c.h.b16 %v176
    %v547 = vunpack.c.l.b16 %v177
    %v548 = vunpack.c.h.b16 %v177
    %v549 = vunpack.c.l.b16 %v178
    %v550 = vunpack.c.h.b16 %v178
    %v551 = vunpack.c.l.b16 %v179
    %v552 = vunpack.c.h.b16 %v179
    %v553 = vunpack.c.l.b16 %v180
    %v554 = vunpack.c.h.b16 %v180
    %v555 = vunpack.c.l.b16 %v181
    %v556 = vunpack.c.h.b16 %v181
    %v557 = vunpack.c.l.b16 %v182
    %v558 = vunpack.c.h.b16 %v182
    %v559 = vunpack.c.l.b16 %v183
    %v560 = vunpack.c.h.b16 %v183
    %v561 = vunpack.c.l.b16 %v184
    %v562 = vunpack.c.h.b16 %v184
    %v563 = vunpack.c.l.b16 %v185
    %v564 = vunpack.c.h.b16 %v185
    %v565 = vunpack.c.l.b16 %v186
    %v566 = vunpack.c.h.b16 %v186
    %v567 = vunpack.c.l.b16 %v187
    %v568 = vunpack.c.h.b16 %v187
    %v569 = vunpack.c.l.b16 %v188
    %v570 = vunpack.c.h.b16 %v188
    %v571 = vunpack.c.l.b16 %v189
    %v572 = vunpack.c.h.b16 %v189
    %v573 = vunpack.c.l.b16 %v190
    %v574 = vunpack.c.h.b16 %v190
    %v575 = vunpack.c.l.b16 %v191
    %v576 = vunpack.c.h.b16 %v191
    %v577 = vunpack.c.l.b16 %v192
    %v578 = vunpack.c.h.b16 %v192
    %v579 = vunpack.c.l.b16 %v193
    %v580 = vunpack.c.h.b16 %v193
    %v581 = vunpack.c.l.b16 %v194
    %v582 = vunpack.c.h.b16 %v194
    %v583 = vunpack.c.l.b16 %v195
    %v584 = vunpack.c.h.b16 %v195
    %v585 = vunpack.c.l.b16 %v196
    %v586 = vunpack.c.h.b16 %v196
    %v587 = vunpack.c.l.b16 %v197
    %v588 = vunpack.c.h.b16 %v197
    %v589 = vunpack.c.l.b16 %v198
    %v590 = vunpack.c.h.b16 %v198
    %v591 = vunpack.c.l.b16 %v199
    %v592 = vunpack.c.h.b16 %v199
    %v593 = vunpack.c.l.b16 %v200
    %v594 = vunpack.c.h.b16 %v200
    %v595 = vpack.c.b16 %v347, %v339
    %v596 = vpack.c.b16 %v348, %v340
    %v597 = vpack.c.b16 %v349, %v341
    %v598 = vpack.c.b16 %v350, %v342
    %v599 = vpack.c.b16 %v351, %v343
    %v600 = vpack.c.b16 %v352, %v344
    %v601 = vpack.c.b16 %v353, %v345
    %v602 = vpack.c.b16 %v354, %v346
    %v603 = vpack.c.b16 %v363, %v355
    %v604 = vpack.c.b16 %v364, %v356
    %v605 = vpack.c.b16 %v365, %v357
    %v606 = vpack.c.b16 %v366, %v358
    %v607 = vpack.c.b16 %v367, %v359
    %v608 = vpack.c.b16 %v368, %v360
    %v609 = vpack.c.b16 %v369, %v361
    %v610 = vpack.c.b16 %v370, %v362
    %v611 = vpack.c.b16 %v379, %v371
    %v612 = vpack.c.b16 %v380, %v372
    %v613 = vpack.c.b16 %v381, %v373
    %v614 = vpack.c.b16 %v382, %v374
    %v615 = vpack.c.b16 %v383, %v375
    %v616 = vpack.c.b16 %v384, %v376
    %v617 = vpack.c.b16 %v385, %v377
    %v618 = vpack.c.b16 %v386, %v378
    %v619 = vpack.c.b16 %v395, %v387
    %v620 = vpack.c.b16 %v396, %v388
    %v621 = vpack.c.b16 %v397, %v389
    %v622 = vpack.c.b16 %v398, %v390
    %v623 = vpack.c.b16 %v399, %v391
    %v624 = vpack.c.b16 %v400, %v392
    %v625 = vpack.c.b16 %v401, %v393
    %v626 = vpack.c.b16 %v402, %v394
    %v627 = vpack.c.b16 %v411, %v403
    %v628 = vpack.c.b16 %v412, %v404
    %v629 = vpack.c.b16 %v413, %v405
    %v630 = vpack.c.b16 %v414, %v406
    %v631 = vpack.c.b16 %v415, %v407
    %v632 = vpack.c.b16 %v416, %v408
    %v633 = vpack.c.b16 %v417, %v409
    %v634 = vpack.c.b16 %v418, %v410
    %v635 = vpack.c.b16 %v427, %v419
    %v636 = vpack.c.b16 %v428, %v420
    %v637 = vpack.c.b16 %v429, %v421
    %v638 = vpack.c.b16 %v430, %v422
    %v639 = vpack.c.b16 %v431, %v423
    %v640 = vpack.c.b16 %v432, %v424
    %v641 = vpack.c.b16 %v433, %v425
    %v642 = vpack.c.b16 %v434, %v426
    %v643 = vpack.c.b16 %v443, %v435
    %v644 = vpack.c.b16 %v444, %v436
    %v645 = vpack.c.b16 %v445, %v437
    %v646 = vpack.c.b16 %v446, %v438
    %v647 = vpack.c.b16 %v447, %v439
    %v648 = vpack.c.b16 %v448, %v440
    %v649 = vpack.c.b16 %v449, %v441
    %v650 = vpack.c.b16 %v450, %v442
    %v651 = vpack.c.b16 %v459, %v451
    %v652 = vpack.c.b16 %v460, %v452
    %v653 = vpack.c.b16 %v461, %v453
    %v654 = vpack.c.b16 %v462, %v454
    %v655 = vpack.c.b16 %v463, %v455
    %v656 = vpack.c.b16 %v464, %v456
    %v657 = vpack.c.b16 %v465, %v457
    %v658 = vpack.c.b16 %v466, %v458
    %v659 = vpack.c.b16 %v475, %v467
    %v660 = vpack.c.b16 %v476, %v468
    %v661 = vpack.c.b16 %v477, %v469
    %v662 = vpack.c.b16 %v478, %v470
    %v663 = vpack.c.b16 %v479, %v471
    %v664 = vpack.c.b16 %v480, %v472
    %v665 = vpack.c.b16 %v481, %v473
    %v666 = vpack.c.b16 %v482, %v474
    %v667 = vpack.c.b16 %v491, %v483
    %v668 = vpack.c.b16 %v492, %v484
    %v669 = vpack.c.b16 %v493, %v485
    %v670 = vpack.c.b16 %v494, %v486
    %v671 = vpack.c.b16 %v495, %v487
    %v672 = vpack.c.b16 %v496, %v488
    %v673 = vpack.c.b16 %v497, %v489
    %v674 = vpack.c.b16 %v498, %v490
    %v675 = vpack.c.b16 %v507, %v499
    %v676 = vpack.c.b16 %v508, %v500
    %v677 = vpack.c.b16 %v509, %v501
    %v678 = vpack.c.b16 %v510, %v502
    %v679 = vpack.c.b16 %v511, %v503
    %v680 = vpack.c.b16 %v512, %v504
    %v681 = vpack.c.b16 %v513, %v505
    %v682 = vpack.c.b16 %v514, %v506
    %v683 = vpack.c.b16 %v523, %v515
    %v684 = vpack.c.b16 %v524, %v516
    %v685 = vpack.c.b16 %v525, %v517
    %v686 = vpack.c.b16 %v526, %v518
    %v687 = vpack.c.b16 %v527, %v519
    %v688 = vpack.c.b16 %v528, %v520
    %v689 = vpack.c.b16 %v529, %v521
    %v690 = vpack.c.b16 %v530, %v522
    %v691 = vpack.c.b16 %v539, %v531
    %v692 = vpack.c.b16 %v540, %v532
    %v693 = vpack.c.b16 %v541, %v533
    %v694 = vpack.c.b16 %v542, %v534
    %v695 = vpack.c.b16 %v543, %v535
    %v696 = vpack.c.b16 %v544, %v536
    %v697 = vpack.c.b16 %v545, %v537
    %v698 = vpack.c.b16 %v546, %v538
    %v699 = vpack.c.b16 %v555, %v547
    %v700 = vpack.c.b16 %v556, %v548
    %v701 = vpack.c.b16 %v557, %v549
    %v702 = vpack.c.b16 %v558, %v550
    %v703 = vpack.c.b16 %v559, %v551
    %v704 = vpack.c.b16 %v560, %v552
    %v705 = vpack.c.b16 %v561, %v553
    %v706 = vpack.c.b16 %v562, %v554
    %v707 = vpack.c.b16 %v571, %v563
    %v708 = vpack.c.b16 %v572, %v564
    %v709 = vpack.c.b16 %v573, %v565
    %v710 = vpack.c.b16 %v574, %v566
    %v711 = vpack.c.b16 %v575, %v567
    %v712 = vpack.c.b16 %v576, %v568
    %v713 = vpack.c.b16 %v577, %v569
    %v714 = vpack.c.b16 %v578, %v570
    %v715 = vpack.c.b16 %v587, %v579
    %v716 = vpack.c.b16 %v588, %v580
    %v717 = vpack.c.b16 %v589, %v581
    %v718 = vpack.c.b16 %v590, %v582
    %v719 = vpack.c.b16 %v591, %v583
    %v720 = vpack.c.b16 %v592, %v584
    %v721 = vpack.c.b16 %v593, %v585
    %v722 = vpack.c.b16 %v594, %v586
    %851 = vmatpush.bf16.msra.mxu0 %v651
    %852 = vmatpush.bf16.msra.mxu0 %v643
    %853 = vmatpush.bf16.msra.mxu0 %v635
    %854 = vmatpush.bf16.msra.mxu0 %v627
    %855 = vmatpush.bf16.msra.mxu0 %v619
    %856 = vmatpush.bf16.msra.mxu0 %v611
    %857 = vmatpush.bf16.msra.mxu0 %v603
    %858 = vmatpush.bf16.msra.mxu0 %v595
    %859 = vmatmul.bf16.gmra.mxu0 %v207
    %v860 = vpop.f32.mrf.mxu0
    %v861 = vadd.f32 0.0, %v860
    %v862 = vpop.f32.mrf.mxu0
    %v863 = vadd.f32 0.0, %v862
    %864 = vdwg.mxu0
    %865 = vmatpush.bf16.msra.mxu0 %v715
    %866 = vmatpush.bf16.msra.mxu0 %v707
    %867 = vmatpush.bf16.msra.mxu0 %v699
    %868 = vmatpush.bf16.msra.mxu0 %v691
    %869 = vmatpush.bf16.msra.mxu0 %v683
    %870 = vmatpush.bf16.msra.mxu0 %v675
    %871 = vmatpush.bf16.msra.mxu0 %v667
    %872 = vmatpush.bf16.msra.mxu0 %v659
    %873 = vmatmul.bf16.gmra.mxu0 %v208
    %v874 = vpop.f32.mrf.mxu0
    %v875 = vadd.f32 %v861, %v874
    %v876 = vpop.f32.mrf.mxu0
    %v877 = vadd.f32 %v863, %v876
    %878 = vdwg.mxu0
    %879 = vmatpush.bf16.msra.mxu0 %v652
    %880 = vmatpush.bf16.msra.mxu0 %v644
    %881 = vmatpush.bf16.msra.mxu0 %v636
    %882 = vmatpush.bf16.msra.mxu0 %v628
    %883 = vmatpush.bf16.msra.mxu0 %v620
    %884 = vmatpush.bf16.msra.mxu0 %v612
    %885 = vmatpush.bf16.msra.mxu0 %v604
    %886 = vmatpush.bf16.msra.mxu0 %v596
    %887 = vmatmul.bf16.gmra.mxu0 %v207
    %v888 = vpop.f32.mrf.mxu0
    %v889 = vadd.f32 0.0, %v888
    %v890 = vpop.f32.mrf.mxu0
    %v891 = vadd.f32 0.0, %v890
    %892 = vdwg.mxu0
    %893 = vmatpush.bf16.msra.mxu0 %v716
    %894 = vmatpush.bf16.msra.mxu0 %v708
    %895 = vmatpush.bf16.msra.mxu0 %v700
    %896 = vmatpush.bf16.msra.mxu0 %v692
    %897 = vmatpush.bf16.msra.mxu0 %v684
    %898 = vmatpush.bf16.msra.mxu0 %v676
    %899 = vmatpush.bf16.msra.mxu0 %v668
    %900 = vmatpush.bf16.msra.mxu0 %v660
    %901 = vmatmul.bf16.gmra.mxu0 %v208
    %v902 = vpop.f32.mrf.mxu0
    %v903 = vadd.f32 %v889, %v902
    %v904 = vpop.f32.mrf.mxu0
    %v905 = vadd.f32 %v891, %v904
    %906 = vdwg.mxu0
    %907 = vmatpush.bf16.msra.mxu0 %v653
    %908 = vmatpush.bf16.msra.mxu0 %v645
    %909 = vmatpush.bf16.msra.mxu0 %v637
    %910 = vmatpush.bf16.msra.mxu0 %v629
    %911 = vmatpush.bf16.msra.mxu0 %v621
    %912 = vmatpush.bf16.msra.mxu0 %v613
    %913 = vmatpush.bf16.msra.mxu0 %v605
    %914 = vmatpush.bf16.msra.mxu0 %v597
    %915 = vmatmul.bf16.gmra.mxu0 %v207
    %v916 = vpop.f32.mrf.mxu0
    %v917 = vadd.f32 0.0, %v916
    %v918 = vpop.f32.mrf.mxu0
    %v919 = vadd.f32 0.0, %v918
    %920 = vdwg.mxu0
    %921 = vmatpush.bf16.msra.mxu0 %v717
    %922 = vmatpush.bf16.msra.mxu0 %v709
    %923 = vmatpush.bf16.msra.mxu0 %v701
    %924 = vmatpush.bf16.msra.mxu0 %v693
    %925 = vmatpush.bf16.msra.mxu0 %v685
    %926 = vmatpush.bf16.msra.mxu0 %v677
    %927 = vmatpush.bf16.msra.mxu0 %v669
    %928 = vmatpush.bf16.msra.mxu0 %v661
    %929 = vmatmul.bf16.gmra.mxu0 %v208
    %v930 = vpop.f32.mrf.mxu0
    %v931 = vadd.f32 %v917, %v930
    %v932 = vpop.f32.mrf.mxu0
    %v933 = vadd.f32 %v919, %v932
    %934 = vdwg.mxu0
    %935 = vmatpush.bf16.msra.mxu0 %v654
    %936 = vmatpush.bf16.msra.mxu0 %v646
    %937 = vmatpush.bf16.msra.mxu0 %v638
    %938 = vmatpush.bf16.msra.mxu0 %v630
    %939 = vmatpush.bf16.msra.mxu0 %v622
    %940 = vmatpush.bf16.msra.mxu0 %v614
    %941 = vmatpush.bf16.msra.mxu0 %v606
    %942 = vmatpush.bf16.msra.mxu0 %v598
    %943 = vmatmul.bf16.gmra.mxu0 %v207
    %v944 = vpop.f32.mrf.mxu0
    %v945 = vadd.f32 0.0, %v944
    %v946 = vpop.f32.mrf.mxu0
    %v947 = vadd.f32 0.0, %v946
    %948 = vdwg.mxu0
    %949 = vmatpush.bf16.msra.mxu0 %v718
    %950 = vmatpush.bf16.msra.mxu0 %v710
    %951 = vmatpush.bf16.msra.mxu0 %v702
    %952 = vmatpush.bf16.msra.mxu0 %v694
    %953 = vmatpush.bf16.msra.mxu0 %v686
    %954 = vmatpush.bf16.msra.mxu0 %v678
    %955 = vmatpush.bf16.msra.mxu0 %v670
    %956 = vmatpush.bf16.msra.mxu0 %v662
    %957 = vmatmul.bf16.gmra.mxu0 %v208
    %v958 = vpop.f32.mrf.mxu0
    %v959 = vadd.f32 %v945, %v958
    %v960 = vpop.f32.mrf.mxu0
    %v961 = vadd.f32 %v947, %v960
    %962 = vdwg.mxu0
    %963 = vmatpush.bf16.msra.mxu0 %v655
    %964 = vmatpush.bf16.msra.mxu0 %v647
    %965 = vmatpush.bf16.msra.mxu0 %v639
    %966 = vmatpush.bf16.msra.mxu0 %v631
    %967 = vmatpush.bf16.msra.mxu0 %v623
    %968 = vmatpush.bf16.msra.mxu0 %v615
    %969 = vmatpush.bf16.msra.mxu0 %v607
    %970 = vmatpush.bf16.msra.mxu0 %v599
    %971 = vmatmul.bf16.gmra.mxu0 %v207
    %v972 = vpop.f32.mrf.mxu0
    %v973 = vadd.f32 0.0, %v972
    %v974 = vpop.f32.mrf.mxu0
    %v975 = vadd.f32 0.0, %v974
    %976 = vdwg.mxu0
    %977 = vmatpush.bf16.msra.mxu0 %v719
    %978 = vmatpush.bf16.msra.mxu0 %v711
    %979 = vmatpush.bf16.msra.mxu0 %v703
    %980 = vmatpush.bf16.msra.mxu0 %v695
    %981 = vmatpush.bf16.msra.mxu0 %v687
    %982 = vmatpush.bf16.msra.mxu0 %v679
    %983 = vmatpush.bf16.msra.mxu0 %v671
    %984 = vmatpush.bf16.msra.mxu0 %v663
    %985 = vmatmul.bf16.gmra.mxu0 %v208
    %v986 = vpop.f32.mrf.mxu0
    %v987 = vadd.f32 %v973, %v986
    %v988 = vpop.f32.mrf.mxu0
    %v989 = vadd.f32 %v975, %v988
    %990 = vdwg.mxu0
    %991 = vmatpush.bf16.msra.mxu0 %v656
    %992 = vmatpush.bf16.msra.mxu0 %v648
    %993 = vmatpush.bf16.msra.mxu0 %v640
    %994 = vmatpush.bf16.msra.mxu0 %v632
    %995 = vmatpush.bf16.msra.mxu0 %v624
    %996 = vmatpush.bf16.msra.mxu0 %v616
    %997 = vmatpush.bf16.msra.mxu0 %v608
    %998 = vmatpush.bf16.msra.mxu0 %v600
    %999 = vmatmul.bf16.gmra.mxu0 %v207
    %v1000 = vpop.f32.mrf.mxu0
    %v1001 = vadd.f32 0.0, %v1000
    %v1002 = vpop.f32.mrf.mxu0
    %v1003 = vadd.f32 0.0, %v1002
    %1004 = vdwg.mxu0
    %1005 = vmatpush.bf16.msra.mxu0 %v720
    %1006 = vmatpush.bf16.msra.mxu0 %v712
    %1007 = vmatpush.bf16.msra.mxu0 %v704
    %1008 = vmatpush.bf16.msra.mxu0 %v696
    %1009 = vmatpush.bf16.msra.mxu0 %v688
    %1010 = vmatpush.bf16.msra.mxu0 %v680
    %1011 = vmatpush.bf16.msra.mxu0 %v672
    %1012 = vmatpush.bf16.msra.mxu0 %v664
    %1013 = vmatmul.bf16.gmra.mxu0 %v208
    %v1014 = vpop.f32.mrf.mxu0
    %v1015 = vadd.f32 %v1001, %v1014
    %v1016 = vpop.f32.mrf.mxu0
    %v1017 = vadd.f32 %v1003, %v1016
    %1018 = vdwg.mxu0
    %1019 = vmatpush.bf16.msra.mxu0 %v657
    %1020 = vmatpush.bf16.msra.mxu0 %v649
    %1021 = vmatpush.bf16.msra.mxu0 %v641
    %1022 = vmatpush.bf16.msra.mxu0 %v633
    %1023 = vmatpush.bf16.msra.mxu0 %v625
    %1024 = vmatpush.bf16.msra.mxu0 %v617
    %1025 = vmatpush.bf16.msra.mxu0 %v609
    %1026 = vmatpush.bf16.msra.mxu0 %v601
    %1027 = vmatmul.bf16.gmra.mxu0 %v207
    %v1028 = vpop.f32.mrf.mxu0
    %v1029 = vadd.f32 0.0, %v1028
    %v1030 = vpop.f32.mrf.mxu0
    %v1031 = vadd.f32 0.0, %v1030
    %1032 = vdwg.mxu0
    %1033 = vmatpush.bf16.msra.mxu0 %v721
    %1034 = vmatpush.bf16.msra.mxu0 %v713
    %1035 = vmatpush.bf16.msra.mxu0 %v705
    %1036 = vmatpush.bf16.msra.mxu0 %v697
    %1037 = vmatpush.bf16.msra.mxu0 %v689
    %1038 = vmatpush.bf16.msra.mxu0 %v681
    %1039 = vmatpush.bf16.msra.mxu0 %v673
    %1040 = vmatpush.bf16.msra.mxu0 %v665
    %1041 = vmatmul.bf16.gmra.mxu0 %v208
    %v1042 = vpop.f32.mrf.mxu0
    %v1043 = vadd.f32 %v1029, %v1042
    %v1044 = vpop.f32.mrf.mxu0
    %v1045 = vadd.f32 %v1031, %v1044
    %1046 = vdwg.mxu0
    %1047 = vmatpush.bf16.msra.mxu0 %v658
    %1048 = vmatpush.bf16.msra.mxu0 %v650
    %1049 = vmatpush.bf16.msra.mxu0 %v642
    %1050 = vmatpush.bf16.msra.mxu0 %v634
    %1051 = vmatpush.bf16.msra.mxu0 %v626
    %1052 = vmatpush.bf16.msra.mxu0 %v618
    %1053 = vmatpush.bf16.msra.mxu0 %v610
    %1054 = vmatpush.bf16.msra.mxu0 %v602
    %1055 = vmatmul.bf16.gmra.mxu0 %v207
    %v1056 = vpop.f32.mrf.mxu0
    %v1057 = vadd.f32 0.0, %v1056
    %v1058 = vpop.f32.mrf.mxu0
    %v1059 = vadd.f32 0.0, %v1058
    %1060 = vdwg.mxu0
    %1061 = vmatpush.bf16.msra.mxu0 %v722
    %1062 = vmatpush.bf16.msra.mxu0 %v714
    %1063 = vmatpush.bf16.msra.mxu0 %v706
    %1064 = vmatpush.bf16.msra.mxu0 %v698
    %1065 = vmatpush.bf16.msra.mxu0 %v690
    %1066 = vmatpush.bf16.msra.mxu0 %v682
    %1067 = vmatpush.bf16.msra.mxu0 %v674
    %1068 = vmatpush.bf16.msra.mxu0 %v666
    %1069 = vmatmul.bf16.gmra.mxu0 %v208
    %v1070 = vpop.f32.mrf.mxu0
    %v1071 = vadd.f32 %v1057, %v1070
    %v1072 = vpop.f32.mrf.mxu0
    %v1073 = vadd.f32 %v1059, %v1072
    %1074 = vdwg.mxu0
    %v1075 = vld [vmem:[%s3] sm:$0xff]
    %v1076 = vld [vmem:[%s3 + $0x8] sm:$0xff]
    %1078 = vset.pattern.permute.xlu0 0
    %1079 = vperm.xlu0 %1078, %v1075
    %v1080 = vpop.permute.xlu0 %1079
    %1083 = vset.pattern.permute.xlu0 0
    %1084 = vperm.xlu0 %1083, %v1076
    %v1085 = vpop.permute.xlu0 %1084
    %v1087 = vmul.f32 %v875, %v1080
    %v1088 = vmul.f32 %v903, %v1080
    %v1089 = vmul.f32 %v931, %v1080
    %v1090 = vmul.f32 %v959, %v1080
    %v1091 = vmul.f32 %v987, %v1080
    %v1092 = vmul.f32 %v1015, %v1080
    %v1093 = vmul.f32 %v1043, %v1080
    %v1094 = vmul.f32 %v1071, %v1080
    %v1095 = vmul.f32 %v877, %v1085
    %v1096 = vmul.f32 %v905, %v1085
    %v1097 = vmul.f32 %v933, %v1085
    %v1098 = vmul.f32 %v961, %v1085
    %v1099 = vmul.f32 %v989, %v1085
    %v1100 = vmul.f32 %v1017, %v1085
    %v1101 = vmul.f32 %v1045, %v1085
    %v1102 = vmul.f32 %v1073, %v1085
    %s1103 = sadd.s32 0, 0
    %s1104 = smul.u32 %s1103, 1024
    %v1105 = vlaneseq
    %v1106 = vand.u32 %v1105, 127
    %v1107 = vadd.s32 %v1106, 128
    %v1108 = vadd.s32 %v1106, 256
    %v1109 = vadd.s32 %v1106, 384
    %v1110 = vadd.s32 %v1106, 512
    %v1111 = vadd.s32 %v1106, 640
    %v1112 = vadd.s32 %v1106, 768
    %v1113 = vadd.s32 %v1106, 896
    %v1114 = vstv %s1104
    %v1115 = vadd.s32 %v1106, %v1114
    %v1116 = vadd.s32 %v1107, %v1114
    %v1117 = vadd.s32 %v1108, %v1114
    %v1118 = vadd.s32 %v1109, %v1114
    %v1119 = vadd.s32 %v1110, %v1114
    %v1120 = vadd.s32 %v1111, %v1114
    %v1121 = vadd.s32 %v1112, %v1114
    %v1122 = vadd.s32 %v1113, %v1114
    %vm1123 = vcmp.lt.s32.totalorder %v1115, 1000
    %vm1124 = vcmp.lt.s32.totalorder %v1116, 1000
    %vm1125 = vcmp.lt.s32.totalorder %v1117, 1000
    %vm1126 = vcmp.lt.s32.totalorder %v1118, 1000
    %vm1127 = vcmp.lt.s32.totalorder %v1119, 1000
    %vm1128 = vcmp.lt.s32.totalorder %v1120, 1000
    %vm1129 = vcmp.lt.s32.totalorder %v1121, 1000
    %vm1130 = vcmp.lt.s32.totalorder %v1122, 1000
    %v1131 = vsel %vm1123, 1, 0
    %v1132 = vsel %vm1124, 1, 0
    %v1133 = vsel %vm1125, 1, 0
    %v1134 = vsel %vm1126, 1, 0
    %v1135 = vsel %vm1127, 1, 0
    %v1136 = vsel %vm1128, 1, 0
    %v1137 = vsel %vm1129, 1, 0
    %v1138 = vsel %vm1130, 1, 0
    %vm1139 = vcmp.eq.s32.totalorder %v1131, 1
    %vm1140 = vcmp.eq.s32.totalorder %v1132, 1
    %vm1141 = vcmp.eq.s32.totalorder %v1133, 1
    %vm1142 = vcmp.eq.s32.totalorder %v1134, 1
    %vm1143 = vcmp.eq.s32.totalorder %v1135, 1
    %vm1144 = vcmp.eq.s32.totalorder %v1136, 1
    %vm1145 = vcmp.eq.s32.totalorder %v1137, 1
    %vm1146 = vcmp.eq.s32.totalorder %v1138, 1
    %v1147 = vsel %vm1139, %v1087, -inf
    %v1148 = vsel %vm1140, %v1088, -inf
    %v1149 = vsel %vm1141, %v1089, -inf
    %v1150 = vsel %vm1142, %v1090, -inf
    %v1151 = vsel %vm1143, %v1091, -inf
    %v1152 = vsel %vm1144, %v1092, -inf
    %v1153 = vsel %vm1145, %v1093, -inf
    %v1154 = vsel %vm1146, %v1094, -inf
    %v1155 = vsel %vm1139, %v1095, -inf
    %v1156 = vsel %vm1140, %v1096, -inf
    %v1157 = vsel %vm1141, %v1097, -inf
    %v1158 = vsel %vm1142, %v1098, -inf
    %v1159 = vsel %vm1143, %v1099, -inf
    %v1160 = vsel %vm1144, %v1100, -inf
    %v1161 = vsel %vm1145, %v1101, -inf
    %v1162 = vsel %vm1146, %v1102, -inf
    %v1163 = vld [vmem:[#allocation2] sm:$0xff]
    %v1164 = vld [vmem:[#allocation2 + $0x8] sm:$0xff]
    %v1165 = vmax.f32 %v1147, %v1149
    %v1166 = vmax.f32 %v1148, %v1150
    %v1167 = vmax.f32 %v1165, %v1151
    %v1168 = vmax.f32 %v1166, %v1152
    %v1169 = vmax.f32 %v1167, %v1153
    %v1170 = vmax.f32 %v1168, %v1154
    %v1171 = vmax.f32 %v1169, %v1170
    %1172 = vmax.xlane.f32.xlu0 %v1171
    %v1173 = vpop.xlane.xlu0 %1172
    %v1174 = vmax.f32 %v1155, %v1157
    %v1175 = vmax.f32 %v1156, %v1158
    %v1176 = vmax.f32 %v1174, %v1159
    %v1177 = vmax.f32 %v1175, %v1160
    %v1178 = vmax.f32 %v1176, %v1161
    %v1179 = vmax.f32 %v1177, %v1162
    %v1180 = vmax.f32 %v1178, %v1179
    %1181 = vmax.xlane.f32.xlu0 %v1180
    %v1182 = vpop.xlane.xlu0 %1181
    %v1183 = vmax.f32 %v1163, %v1173
    %v1184 = vmax.f32 %v1164, %v1182
    %v1185 = vmax.f32 %v1183, -1e+30
    %v1186 = vmax.f32 %v1184, -1e+30
    %v1187 = vld [vmem:[#allocation3] sm:$0xff]
    %v1188 = vld [vmem:[#allocation3 + $0x8] sm:$0xff]
    %v1189 = vsub.f32 %v1163, %v1185
    %v1190 = vsub.f32 %v1164, %v1186
    %v1191 = vmul.f32 %v1189, 1.442695
    %v1192 = vpow.pop %v1191
    %v1193 = vmul.f32 %v1190, 1.442695
    %v1194 = vpow.pop %v1193
    %v1195 = vmul.f32 %v1187, %v1192
    %v1196 = vmul.f32 %v1188, %v1194
    %1198 = vset.pattern.permute.xlu0 0
    %1199 = vperm.xlu0 %1198, %v1185
    %v1200 = vpop.permute.xlu0 %1199
    %1203 = vset.pattern.permute.xlu0 0
    %1204 = vperm.xlu0 %1203, %v1186
    %v1205 = vpop.permute.xlu0 %1204
    %v1207 = vsub.f32 %v1147, %v1200
    %v1208 = vsub.f32 %v1148, %v1200
    %v1209 = vsub.f32 %v1149, %v1200
    %v1210 = vsub.f32 %v1150, %v1200
    %v1211 = vsub.f32 %v1151, %v1200
    %v1212 = vsub.f32 %v1152, %v1200
    %v1213 = vsub.f32 %v1153, %v1200
    %v1214 = vsub.f32 %v1154, %v1200
    %v1215 = vsub.f32 %v1155, %v1205
    %v1216 = vsub.f32 %v1156, %v1205
    %v1217 = vsub.f32 %v1157, %v1205
    %v1218 = vsub.f32 %v1158, %v1205
    %v1219 = vsub.f32 %v1159, %v1205
    %v1220 = vsub.f32 %v1160, %v1205
    %v1221 = vsub.f32 %v1161, %v1205
    %v1222 = vsub.f32 %v1162, %v1205
    %v1223 = vmul.f32 %v1207, 1.442695
    %v1224 = vpow.pop %v1223
    %v1225 = vmul.f32 %v1208, 1.442695
    %v1226 = vpow.pop %v1225
    %v1227 = vmul.f32 %v1209, 1.442695
    %v1228 = vpow.pop %v1227
    %v1229 = vmul.f32 %v1210, 1.442695
    %v1230 = vpow.pop %v1229
    %v1231 = vmul.f32 %v1211, 1.442695
    %v1232 = vpow.pop %v1231
    %v1233 = vmul.f32 %v1212, 1.442695
    %v1234 = vpow.pop %v1233
    %v1235 = vmul.f32 %v1213, 1.442695
    %v1236 = vpow.pop %v1235
    %v1237 = vmul.f32 %v1214, 1.442695
    %v1238 = vpow.pop %v1237
    %v1239 = vmul.f32 %v1215, 1.442695
    %v1240 = vpow.pop %v1239
    %v1241 = vmul.f32 %v1216, 1.442695
    %v1242 = vpow.pop %v1241
    %v1243 = vmul.f32 %v1217, 1.442695
    %v1244 = vpow.pop %v1243
    %v1245 = vmul.f32 %v1218, 1.442695
    %v1246 = vpow.pop %v1245
    %v1247 = vmul.f32 %v1219, 1.442695
    %v1248 = vpow.pop %v1247
    %v1249 = vmul.f32 %v1220, 1.442695
    %v1250 = vpow.pop %v1249
    %v1251 = vmul.f32 %v1221, 1.442695
    %v1252 = vpow.pop %v1251
    %v1253 = vmul.f32 %v1222, 1.442695
    %v1254 = vpow.pop %v1253
    %v1255 = vadd.f32 %v1224, %v1226
    %v1256 = vadd.f32 %v1255, %v1228
    %v1257 = vadd.f32 %v1256, %v1230
    %v1258 = vadd.f32 %v1257, %v1232
    %v1259 = vadd.f32 %v1258, %v1234
    %v1260 = vadd.f32 %v1259, %v1236
    %v1261 = vadd.f32 %v1260, %v1238
    %1262 = vadd.xlane.f32.xlu0 %v1261
    %v1263 = vpop.xlane.xlu0 %1262
    %v1264 = vadd.f32 %v1240, %v1242
    %v1265 = vadd.f32 %v1264, %v1244
    %v1266 = vadd.f32 %v1265, %v1246
    %v1267 = vadd.f32 %v1266, %v1248
    %v1268 = vadd.f32 %v1267, %v1250
    %v1269 = vadd.f32 %v1268, %v1252
    %v1270 = vadd.f32 %v1269, %v1254
    %1271 = vadd.xlane.f32.xlu0 %v1270
    %v1272 = vpop.xlane.xlu0 %1271
    %v1273 = vadd.f32 %v1195, %v1263
    %v1274 = vadd.f32 %v1196, %v1272
    %vm1275 = vcmask 7168
    %1276 = vst.msk [vmem:[#allocation3] sm:$0xff] %vm1275, %v1273
    %1277 = vst.msk [vmem:[#allocation3 + $0x8] sm:$0xff] %vm1275, %v1274
    %1278 = vst.msk [vmem:[#allocation2] sm:$0xff] %vm1275, %v1183
    %1279 = vst.msk [vmem:[#allocation2 + $0x8] sm:$0xff] %vm1275, %v1184
    %s1280 = sld [smem:[#allocation8 + $0x1]]
    %p1281 = scmp.ne.s32.totalorder %s1280, 0
    // Predicated region
    $region26: #{_logits_processor_pallas.1} parent=1 // pred_check
      %p1282 = pneg %p1281
    $region27: #{_logits_processor_pallas.1} parent=1 // pred_check_branch
      %1284 = sbr.rel (%p1282) target = $region29
    $region28: #{_logits_processor_pallas.1} parent=1 // pred_region
      %v1285 = vlaneseq
      %v1286 = vshrl.u32 %v1285, 7
      %v1287 = vadd.s32 %v1286, 8
      %v1288 = vmul.u32 %v1286, 2654435769
      %v1289 = vmul.u32 %v1287, 2654435769
      %v1290 = vmul.u32 %v1115, 2246822507
      %v1291 = vmul.u32 %v1116, 2246822507
      %v1292 = vmul.u32 %v1117, 2246822507
      %v1293 = vmul.u32 %v1118, 2246822507
      %v1294 = vmul.u32 %v1119, 2246822507
      %v1295 = vmul.u32 %v1120, 2246822507
      %v1296 = vmul.u32 %v1121, 2246822507
      %v1297 = vmul.u32 %v1122, 2246822507
      %v1298 = vadd.s32 %v1288, %v1290
      %v1299 = vadd.s32 %v1288, %v1291
      %v1300 = vadd.s32 %v1288, %v1292
      %v1301 = vadd.s32 %v1288, %v1293
      %v1302 = vadd.s32 %v1288, %v1294
      %v1303 = vadd.s32 %v1288, %v1295
      %v1304 = vadd.s32 %v1288, %v1296
      %v1305 = vadd.s32 %v1288, %v1297
      %v1306 = vadd.s32 %v1289, %v1290
      %v1307 = vadd.s32 %v1289, %v1291
      %v1308 = vadd.s32 %v1289, %v1292
      %v1309 = vadd.s32 %v1289, %v1293
      %v1310 = vadd.s32 %v1289, %v1294
      %v1311 = vadd.s32 %v1289, %v1295
      %v1312 = vadd.s32 %v1289, %v1296
      %v1313 = vadd.s32 %v1289, %v1297
      %s1314 = sld [smem:[#allocation8]]
      %v1315 = vstv %s1314
      %v1316 = vadd.s32 %v1298, %v1315
      %v1317 = vadd.s32 %v1299, %v1315
      %v1318 = vadd.s32 %v1300, %v1315
      %v1319 = vadd.s32 %v1301, %v1315
      %v1320 = vadd.s32 %v1302, %v1315
      %v1321 = vadd.s32 %v1303, %v1315
      %v1322 = vadd.s32 %v1304, %v1315
      %v1323 = vadd.s32 %v1305, %v1315
      %v1324 = vadd.s32 %v1306, %v1315
      %v1325 = vadd.s32 %v1307, %v1315
      %v1326 = vadd.s32 %v1308, %v1315
      %v1327 = vadd.s32 %v1309, %v1315
      %v1328 = vadd.s32 %v1310, %v1315
      %v1329 = vadd.s32 %v1311, %v1315
      %v1330 = vadd.s32 %v1312, %v1315
      %v1331 = vadd.s32 %v1313, %v1315
      %v1332 = vshra.s32 %v1316, 16
      %v1333 = vshra.s32 %v1317, 16
      %v1334 = vshra.s32 %v1318, 16
      %v1335 = vshra.s32 %v1319, 16
      %v1336 = vshra.s32 %v1320, 16
      %v1337 = vshra.s32 %v1321, 16
      %v1338 = vshra.s32 %v1322, 16
      %v1339 = vshra.s32 %v1323, 16
      %v1340 = vshra.s32 %v1324, 16
      %v1341 = vshra.s32 %v1325, 16
      %v1342 = vshra.s32 %v1326, 16
      %v1343 = vshra.s32 %v1327, 16
      %v1344 = vshra.s32 %v1328, 16
      %v1345 = vshra.s32 %v1329, 16
      %v1346 = vshra.s32 %v1330, 16
      %v1347 = vshra.s32 %v1331, 16
      %v1348 = vand.u32 %v1332, 65535
      %v1349 = vand.u32 %v1333, 65535
      %v1350 = vand.u32 %v1334, 65535
      %v1351 = vand.u32 %v1335, 65535
      %v1352 = vand.u32 %v1336, 65535
      %v1353 = vand.u32 %v1337, 65535
      %v1354 = vand.u32 %v1338, 65535
      %v1355 = vand.u32 %v1339, 65535
      %v1356 = vand.u32 %v1340, 65535
      %v1357 = vand.u32 %v1341, 65535
      %v1358 = vand.u32 %v1342, 65535
      %v1359 = vand.u32 %v1343, 65535
      %v1360 = vand.u32 %v1344, 65535
      %v1361 = vand.u32 %v1345, 65535
      %v1362 = vand.u32 %v1346, 65535
      %v1363 = vand.u32 %v1347, 65535
      %v1364 = vxor.u32 %v1316, %v1348
      %v1365 = vxor.u32 %v1317, %v1349
      %v1366 = vxor.u32 %v1318, %v1350
      %v1367 = vxor.u32 %v1319, %v1351
      %v1368 = vxor.u32 %v1320, %v1352
      %v1369 = vxor.u32 %v1321, %v1353
      %v1370 = vxor.u32 %v1322, %v1354
      %v1371 = vxor.u32 %v1323, %v1355
      %v1372 = vxor.u32 %v1324, %v1356
      %v1373 = vxor.u32 %v1325, %v1357
      %v1374 = vxor.u32 %v1326, %v1358
      %v1375 = vxor.u32 %v1327, %v1359
      %v1376 = vxor.u32 %v1328, %v1360
      %v1377 = vxor.u32 %v1329, %v1361
      %v1378 = vxor.u32 %v1330, %v1362
      %v1379 = vxor.u32 %v1331, %v1363
      %v1380 = vmul.u32 %v1364, 2146121005
      %v1381 = vmul.u32 %v1365, 2146121005
      %v1382 = vmul.u32 %v1366, 2146121005
      %v1383 = vmul.u32 %v1367, 2146121005
      %v1384 = vmul.u32 %v1368, 2146121005
      %v1385 = vmul.u32 %v1369, 2146121005
      %v1386 = vmul.u32 %v1370, 2146121005
      %v1387 = vmul.u32 %v1371, 2146121005
      %v1388 = vmul.u32 %v1372, 2146121005
      %v1389 = vmul.u32 %v1373, 2146121005
      %v1390 = vmul.u32 %v1374, 2146121005
      %v1391 = vmul.u32 %v1375, 2146121005
      %v1392 = vmul.u32 %v1376, 2146121005
      %v1393 = vmul.u32 %v1377, 2146121005
      %v1394 = vmul.u32 %v1378, 2146121005
      %v1395 = vmul.u32 %v1379, 2146121005
      %v1396 = vshra.s32 %v1380, 15
      %v1397 = vshra.s32 %v1381, 15
      %v1398 = vshra.s32 %v1382, 15
      %v1399 = vshra.s32 %v1383, 15
      %v1400 = vshra.s32 %v1384, 15
      %v1401 = vshra.s32 %v1385, 15
      %v1402 = vshra.s32 %v1386, 15
      %v1403 = vshra.s32 %v1387, 15
      %v1404 = vshra.s32 %v1388, 15
      %v1405 = vshra.s32 %v1389, 15
      %v1406 = vshra.s32 %v1390, 15
      %v1407 = vshra.s32 %v1391, 15
      %v1408 = vshra.s32 %v1392, 15
      %v1409 = vshra.s32 %v1393, 15
      %v1410 = vshra.s32 %v1394, 15
      %v1411 = vshra.s32 %v1395, 15
      %v1412 = vand.u32 %v1396, 131071
      %v1413 = vand.u32 %v1397, 131071
      %v1414 = vand.u32 %v1398, 131071
      %v1415 = vand.u32 %v1399, 131071
      %v1416 = vand.u32 %v1400, 131071
      %v1417 = vand.u32 %v1401, 131071
      %v1418 = vand.u32 %v1402, 131071
      %v1419 = vand.u32 %v1403, 131071
      %v1420 = vand.u32 %v1404, 131071
      %v1421 = vand.u32 %v1405, 131071
      %v1422 = vand.u32 %v1406, 131071
      %v1423 = vand.u32 %v1407, 131071
      %v1424 = vand.u32 %v1408, 131071
      %v1425 = vand.u32 %v1409, 131071
      %v1426 = vand.u32 %v1410, 131071
      %v1427 = vand.u32 %v1411, 131071
      %v1428 = vxor.u32 %v1380, %v1412
      %v1429 = vxor.u32 %v1381, %v1413
      %v1430 = vxor.u32 %v1382, %v1414
      %v1431 = vxor.u32 %v1383, %v1415
      %v1432 = vxor.u32 %v1384, %v1416
      %v1433 = vxor.u32 %v1385, %v1417
      %v1434 = vxor.u32 %v1386, %v1418
      %v1435 = vxor.u32 %v1387, %v1419
      %v1436 = vxor.u32 %v1388, %v1420
      %v1437 = vxor.u32 %v1389, %v1421
      %v1438 = vxor.u32 %v1390, %v1422
      %v1439 = vxor.u32 %v1391, %v1423
      %v1440 = vxor.u32 %v1392, %v1424
      %v1441 = vxor.u32 %v1393, %v1425
      %v1442 = vxor.u32 %v1394, %v1426
      %v1443 = vxor.u32 %v1395, %v1427
      %v1444 = vmul.u32 %v1428, 2221713035
      %v1445 = vmul.u32 %v1429, 2221713035
      %v1446 = vmul.u32 %v1430, 2221713035
      %v1447 = vmul.u32 %v1431, 2221713035
      %v1448 = vmul.u32 %v1432, 2221713035
      %v1449 = vmul.u32 %v1433, 2221713035
      %v1450 = vmul.u32 %v1434, 2221713035
      %v1451 = vmul.u32 %v1435, 2221713035
      %v1452 = vmul.u32 %v1436, 2221713035
      %v1453 = vmul.u32 %v1437, 2221713035
      %v1454 = vmul.u32 %v1438, 2221713035
      %v1455 = vmul.u32 %v1439, 2221713035
      %v1456 = vmul.u32 %v1440, 2221713035
      %v1457 = vmul.u32 %v1441, 2221713035
      %v1458 = vmul.u32 %v1442, 2221713035
      %v1459 = vmul.u32 %v1443, 2221713035
      %v1460 = vshra.s32 %v1444, 16
      %v1461 = vshra.s32 %v1445, 16
      %v1462 = vshra.s32 %v1446, 16
      %v1463 = vshra.s32 %v1447, 16
      %v1464 = vshra.s32 %v1448, 16
      %v1465 = vshra.s32 %v1449, 16
      %v1466 = vshra.s32 %v1450, 16
      %v1467 = vshra.s32 %v1451, 16
      %v1468 = vshra.s32 %v1452, 16
      %v1469 = vshra.s32 %v1453, 16
      %v1470 = vshra.s32 %v1454, 16
      %v1471 = vshra.s32 %v1455, 16
      %v1472 = vshra.s32 %v1456, 16
      %v1473 = vshra.s32 %v1457, 16
      %v1474 = vshra.s32 %v1458, 16
      %v1475 = vshra.s32 %v1459, 16
      %v1476 = vand.u32 %v1460, 65535
      %v1477 = vand.u32 %v1461, 65535
      %v1478 = vand.u32 %v1462, 65535
      %v1479 = vand.u32 %v1463, 65535
      %v1480 = vand.u32 %v1464, 65535
      %v1481 = vand.u32 %v1465, 65535
      %v1482 = vand.u32 %v1466, 65535
      %v1483 = vand.u32 %v1467, 65535
      %v1484 = vand.u32 %v1468, 65535
      %v1485 = vand.u32 %v1469, 65535
      %v1486 = vand.u32 %v1470, 65535
      %v1487 = vand.u32 %v1471, 65535
      %v1488 = vand.u32 %v1472, 65535
      %v1489 = vand.u32 %v1473, 65535
      %v1490 = vand.u32 %v1474, 65535
      %v1491 = vand.u32 %v1475, 65535
      %v1492 = vxor.u32 %v1444, %v1476
      %v1493 = vxor.u32 %v1445, %v1477
      %v1494 = vxor.u32 %v1446, %v1478
      %v1495 = vxor.u32 %v1447, %v1479
      %v1496 = vxor.u32 %v1448, %v1480
      %v1497 = vxor.u32 %v1449, %v1481
      %v1498 = vxor.u32 %v1450, %v1482
      %v1499 = vxor.u32 %v1451, %v1483
      %v1500 = vxor.u32 %v1452, %v1484
      %v1501 = vxor.u32 %v1453, %v1485
      %v1502 = vxor.u32 %v1454, %v1486
      %v1503 = vxor.u32 %v1455, %v1487
      %v1504 = vxor.u32 %v1456, %v1488
      %v1505 = vxor.u32 %v1457, %v1489
      %v1506 = vxor.u32 %v1458, %v1490
      %v1507 = vxor.u32 %v1459, %v1491
      %v1508 = vand.u32 %v1492, 16777215
      %v1509 = vand.u32 %v1493, 16777215
      %v1510 = vand.u32 %v1494, 16777215
      %v1511 = vand.u32 %v1495, 16777215
      %v1512 = vand.u32 %v1496, 16777215
      %v1513 = vand.u32 %v1497, 16777215
      %v1514 = vand.u32 %v1498, 16777215
      %v1515 = vand.u32 %v1499, 16777215
      %v1516 = vand.u32 %v1500, 16777215
      %v1517 = vand.u32 %v1501, 16777215
      %v1518 = vand.u32 %v1502, 16777215
      %v1519 = vand.u32 %v1503, 16777215
      %v1520 = vand.u32 %v1504, 16777215
      %v1521 = vand.u32 %v1505, 16777215
      %v1522 = vand.u32 %v1506, 16777215
      %v1523 = vand.u32 %v1507, 16777215
      %v1524 = vcvt.s32.f32 %v1508
      %v1525 = vcvt.s32.f32 %v1509
      %v1526 = vcvt.s32.f32 %v1510
      %v1527 = vcvt.s32.f32 %v1511
      %v1528 = vcvt.s32.f32 %v1512
      %v1529 = vcvt.s32.f32 %v1513
      %v1530 = vcvt.s32.f32 %v1514
      %v1531 = vcvt.s32.f32 %v1515
      %v1532 = vcvt.s32.f32 %v1516
      %v1533 = vcvt.s32.f32 %v1517
      %v1534 = vcvt.s32.f32 %v1518
      %v1535 = vcvt.s32.f32 %v1519
      %v1536 = vcvt.s32.f32 %v1520
      %v1537 = vcvt.s32.f32 %v1521
      %v1538 = vcvt.s32.f32 %v1522
      %v1539 = vcvt.s32.f32 %v1523
      %v1540 = vadd.f32 %v1524, 0.5
      %v1541 = vadd.f32 %v1525, 0.5
      %v1542 = vadd.f32 %v1526, 0.5
      %v1543 = vadd.f32 %v1527, 0.5
      %v1544 = vadd.f32 %v1528, 0.5
      %v1545 = vadd.f32 %v1529, 0.5
      %v1546 = vadd.f32 %v1530, 0.5
      %v1547 = vadd.f32 %v1531, 0.5
      %v1548 = vadd.f32 %v1532, 0.5
      %v1549 = vadd.f32 %v1533, 0.5
      %v1550 = vadd.f32 %v1534, 0.5
      %v1551 = vadd.f32 %v1535, 0.5
      %v1552 = vadd.f32 %v1536, 0.5
      %v1553 = vadd.f32 %v1537, 0.5
      %v1554 = vadd.f32 %v1538, 0.5
      %v1555 = vadd.f32 %v1539, 0.5
      %v1556 = vmul.f32 %v1540, 5.9604645e-08
      %v1557 = vmul.f32 %v1541, 5.9604645e-08
      %v1558 = vmul.f32 %v1542, 5.9604645e-08
      %v1559 = vmul.f32 %v1543, 5.9604645e-08
      %v1560 = vmul.f32 %v1544, 5.9604645e-08
      %v1561 = vmul.f32 %v1545, 5.9604645e-08
      %v1562 = vmul.f32 %v1546, 5.9604645e-08
      %v1563 = vmul.f32 %v1547, 5.9604645e-08
      %v1564 = vmul.f32 %v1548, 5.9604645e-08
      %v1565 = vmul.f32 %v1549, 5.9604645e-08
      %v1566 = vmul.f32 %v1550, 5.9604645e-08
      %v1567 = vmul.f32 %v1551, 5.9604645e-08
      %v1568 = vmul.f32 %v1552, 5.9604645e-08
      %v1569 = vmul.f32 %v1553, 5.9604645e-08
      %v1570 = vmul.f32 %v1554, 5.9604645e-08
      %v1571 = vmul.f32 %v1555, 5.9604645e-08
      %v1572 = vlog2.pop %v1556
      %v1573 = vmul.f32 %v1572, 0.6931472
      %v1574 = vlog2.pop %v1557
      %v1575 = vmul.f32 %v1574, 0.6931472
      %v1576 = vlog2.pop %v1558
      %v1577 = vmul.f32 %v1576, 0.6931472
      %v1578 = vlog2.pop %v1559
      %v1579 = vmul.f32 %v1578, 0.6931472
      %v1580 = vlog2.pop %v1560
      %v1581 = vmul.f32 %v1580, 0.6931472
      %v1582 = vlog2.pop %v1561
      %v1583 = vmul.f32 %v1582, 0.6931472
      %v1584 = vlog2.pop %v1562
      %v1585 = vmul.f32 %v1584, 0.6931472
      %v1586 = vlog2.pop %v1563
      %v1587 = vmul.f32 %v1586, 0.6931472
      %v1588 = vlog2.pop %v1564
      %v1589 = vmul.f32 %v1588, 0.6931472
      %v1590 = vlog2.pop %v1565
      %v1591 = vmul.f32 %v1590, 0.6931472
      %v1592 = vlog2.pop %v1566
      %v1593 = vmul.f32 %v1592, 0.6931472
      %v1594 = vlog2.pop %v1567
      %v1595 = vmul.f32 %v1594, 0.6931472
      %v1596 = vlog2.pop %v1568
      %v1597 = vmul.f32 %v1596, 0.6931472
      %v1598 = vlog2.pop %v1569
      %v1599 = vmul.f32 %v1598, 0.6931472
      %v1600 = vlog2.pop %v1570
      %v1601 = vmul.f32 %v1600, 0.6931472
      %v1602 = vlog2.pop %v1571
      %v1603 = vmul.f32 %v1602, 0.6931472
      %v1604 = vsub.f32 0.0, %v1573
      %v1605 = vsub.f32 0.0, %v1575
      %v1606 = vsub.f32 0.0, %v1577
      %v1607 = vsub.f32 0.0, %v1579
      %v1608 = vsub.f32 0.0, %v1581
      %v1609 = vsub.f32 0.0, %v1583
      %v1610 = vsub.f32 0.0, %v1585
      %v1611 = vsub.f32 0.0, %v1587
      %v1612 = vsub.f32 0.0, %v1589
      %v1613 = vsub.f32 0.0, %v1591
      %v1614 = vsub.f32 0.0, %v1593
      %v1615 = vsub.f32 0.0, %v1595
      %v1616 = vsub.f32 0.0, %v1597
      %v1617 = vsub.f32 0.0, %v1599
      %v1618 = vsub.f32 0.0, %v1601
      %v1619 = vsub.f32 0.0, %v1603
      %v1620 = vlog2.pop %v1604
      %v1621 = vmul.f32 %v1620, 0.6931472
      %v1622 = vlog2.pop %v1605
      %v1623 = vmul.f32 %v1622, 0.6931472
      %v1624 = vlog2.pop %v1606
      %v1625 = vmul.f32 %v1624, 0.6931472
      %v1626 = vlog2.pop %v1607
      %v1627 = vmul.f32 %v1626, 0.6931472
      %v1628 = vlog2.pop %v1608
      %v1629 = vmul.f32 %v1628, 0.6931472
      %v1630 = vlog2.pop %v1609
      %v1631 = vmul.f32 %v1630, 0.6931472
      %v1632 = vlog2.pop %v1610
      %v1633 = vmul.f32 %v1632, 0.6931472
      %v1634 = vlog2.pop %v1611
      %v1635 = vmul.f32 %v1634, 0.6931472
      %v1636 = vlog2.pop %v1612
      %v1637 = vmul.f32 %v1636, 0.6931472
      %v1638 = vlog2.pop %v1613
      %v1639 = vmul.f32 %v1638, 0.6931472
      %v1640 = vlog2.pop %v1614
      %v1641 = vmul.f32 %v1640, 0.6931472
      %v1642 = vlog2.pop %v1615
      %v1643 = vmul.f32 %v1642, 0.6931472
      %v1644 = vlog2.pop %v1616
      %v1645 = vmul.f32 %v1644, 0.6931472
      %v1646 = vlog2.pop %v1617
      %v1647 = vmul.f32 %v1646, 0.6931472
      %v1648 = vlog2.pop %v1618
      %v1649 = vmul.f32 %v1648, 0.6931472
      %v1650 = vlog2.pop %v1619
      %v1651 = vmul.f32 %v1650, 0.6931472
      %v1652 = vsub.f32 0.0, %v1621
      %v1653 = vsub.f32 0.0, %v1623
      %v1654 = vsub.f32 0.0, %v1625
      %v1655 = vsub.f32 0.0, %v1627
      %v1656 = vsub.f32 0.0, %v1629
      %v1657 = vsub.f32 0.0, %v1631
      %v1658 = vsub.f32 0.0, %v1633
      %v1659 = vsub.f32 0.0, %v1635
      %v1660 = vsub.f32 0.0, %v1637
      %v1661 = vsub.f32 0.0, %v1639
      %v1662 = vsub.f32 0.0, %v1641
      %v1663 = vsub.f32 0.0, %v1643
      %v1664 = vsub.f32 0.0, %v1645
      %v1665 = vsub.f32 0.0, %v1647
      %v1666 = vsub.f32 0.0, %v1649
      %v1667 = vsub.f32 0.0, %v1651
      %v1668 = vld [vmem:[%s4] sm:$0xff]
      %v1669 = vld [vmem:[%s4 + $0x8] sm:$0xff]
      %v1670 = vsub.f32 1.0, %v1668
      %v1671 = vsub.f32 1.0, %v1669
      %1673 = vset.pattern.permute.xlu0 0
      %1674 = vperm.xlu0 %1673, %v1670
      %v1675 = vpop.permute.xlu0 %1674
      %1678 = vset.pattern.permute.xlu0 0
      %1679 = vperm.xlu0 %1678, %v1671
      %v1680 = vpop.permute.xlu0 %1679
      %v1682 = vmul.f32 %v1652, %v1675
      %v1683 = vmul.f32 %v1653, %v1675
      %v1684 = vmul.f32 %v1654, %v1675
      %v1685 = vmul.f32 %v1655, %v1675
      %v1686 = vmul.f32 %v1656, %v1675
      %v1687 = vmul.f32 %v1657, %v1675
      %v1688 = vmul.f32 %v1658, %v1675
      %v1689 = vmul.f32 %v1659, %v1675
      %v1690 = vmul.f32 %v1660, %v1680
      %v1691 = vmul.f32 %v1661, %v1680
      %v1692 = vmul.f32 %v1662, %v1680
      %v1693 = vmul.f32 %v1663, %v1680
      %v1694 = vmul.f32 %v1664, %v1680
      %v1695 = vmul.f32 %v1665, %v1680
      %v1696 = vmul.f32 %v1666, %v1680
      %v1697 = vmul.f32 %v1667, %v1680
      %v1698 = vadd.f32 %v1147, %v1682
      %v1699 = vadd.f32 %v1148, %v1683
      %v1700 = vadd.f32 %v1149, %v1684
      %v1701 = vadd.f32 %v1150, %v1685
      %v1702 = vadd.f32 %v1151, %v1686
      %v1703 = vadd.f32 %v1152, %v1687
      %v1704 = vadd.f32 %v1153, %v1688
      %v1705 = vadd.f32 %v1154, %v1689
      %v1706 = vadd.f32 %v1155, %v1690
      %v1707 = vadd.f32 %v1156, %v1691
      %v1708 = vadd.f32 %v1157, %v1692
      %v1709 = vadd.f32 %v1158, %v1693
      %v1710 = vadd.f32 %v1159, %v1694
      %v1711 = vadd.f32 %v1160, %v1695
      %v1712 = vadd.f32 %v1161, %v1696
      %v1713 = vadd.f32 %v1162, %v1697
      %v1714 = vmax.f32 %v1698, %v1700
      %v1715 = vmax.f32 %v1699, %v1701
      %v1716 = vmax.f32 %v1714, %v1702
      %v1717 = vmax.f32 %v1715, %v1703
      %v1718 = vmax.f32 %v1716, %v1704
      %v1719 = vmax.f32 %v1717, %v1705
      %v1720 = vmax.f32 %v1718, %v1719
      %1721 = vmax.xlane.f32.xlu0 %v1720
      %v1722 = vpop.xlane.xlu0 %1721
      %v1723 = vmax.f32 %v1706, %v1708
      %v1724 = vmax.f32 %v1707, %v1709
      %v1725 = vmax.f32 %v1723, %v1710
      %v1726 = vmax.f32 %v1724, %v1711
      %v1727 = vmax.f32 %v1725, %v1712
      %v1728 = vmax.f32 %v1726, %v1713
      %v1729 = vmax.f32 %v1727, %v1728
      %1730 = vmax.xlane.f32.xlu0 %v1729
      %v1731 = vpop.xlane.xlu0 %1730
      %vm1732 = vcmp.eq.f32.partialorder %v1698, %v1722
      %vm1733 = vcmp.eq.f32.partialorder %v1699, %v1722
      %vm1734 = vcmp.eq.f32.partialorder %v1700, %v1722
      %vm1735 = vcmp.eq.f32.partialorder %v1701, %v1722
      %vm1736 = vcmp.eq.f32.partialorder %v1702, %v1722
      %vm1737 = vcmp.eq.f32.partialorder %v1703, %v1722
      %vm1738 = vcmp.eq.f32.partialorder %v1704, %v1722
      %vm1739 = vcmp.eq.f32.partialorder %v1705, %v1722
      %vm1740 = vcmp.eq.f32.partialorder %v1706, %v1731
      %vm1741 = vcmp.eq.f32.partialorder %v1707, %v1731
      %vm1742 = vcmp.eq.f32.partialorder %v1708, %v1731
      %vm1743 = vcmp.eq.f32.partialorder %v1709, %v1731
      %vm1744 = vcmp.eq.f32.partialorder %v1710, %v1731
      %vm1745 = vcmp.eq.f32.partialorder %v1711, %v1731
      %vm1746 = vcmp.eq.f32.partialorder %v1712, %v1731
      %vm1747 = vcmp.eq.f32.partialorder %v1713, %v1731
      %v1748 = vsel %vm1732, %v1115, 2147483647
      %v1749 = vsel %vm1733, %v1116, 2147483647
      %v1750 = vsel %vm1734, %v1117, 2147483647
      %v1751 = vsel %vm1735, %v1118, 2147483647
      %v1752 = vsel %vm1736, %v1119, 2147483647
      %v1753 = vsel %vm1737, %v1120, 2147483647
      %v1754 = vsel %vm1738, %v1121, 2147483647
      %v1755 = vsel %vm1739, %v1122, 2147483647
      %v1756 = vsel %vm1740, %v1115, 2147483647
      %v1757 = vsel %vm1741, %v1116, 2147483647
      %v1758 = vsel %vm1742, %v1117, 2147483647
      %v1759 = vsel %vm1743, %v1118, 2147483647
      %v1760 = vsel %vm1744, %v1119, 2147483647
      %v1761 = vsel %vm1745, %v1120, 2147483647
      %v1762 = vsel %vm1746, %v1121, 2147483647
      %v1763 = vsel %vm1747, %v1122, 2147483647
      %vm1764 = vcmp.lt.s32.totalorder %v1748, %v1750
      %v1765 = vsel %vm1764, %v1748, %v1750
      %vm1766 = vcmp.lt.s32.totalorder %v1749, %v1751
      %v1767 = vsel %vm1766, %v1749, %v1751
      %vm1768 = vcmp.lt.s32.totalorder %v1765, %v1752
      %v1769 = vsel %vm1768, %v1765, %v1752
      %vm1770 = vcmp.lt.s32.totalorder %v1767, %v1753
      %v1771 = vsel %vm1770, %v1767, %v1753
      %vm1772 = vcmp.lt.s32.totalorder %v1769, %v1754
      %v1773 = vsel %vm1772, %v1769, %v1754
      %vm1774 = vcmp.lt.s32.totalorder %v1771, %v1755
      %v1775 = vsel %vm1774, %v1771, %v1755
      %vm1776 = vcmp.lt.s32.totalorder %v1773, %v1775
      %v1777 = vsel %vm1776, %v1773, %v1775
      %v1778 = vand.u32 %v1777, 65535
      %v1779 = vshra.s32 %v1777, 16
      %v1780 = vcvt.s32.f32 %v1778
      %v1781 = vcvt.s32.f32 %v1779
      %1782 = vmin.xlane.f32.xlu0 %v1781
      %v1783 = vpop.xlane.xlu0 %1782
      %vm1784 = vcmp.eq.f32.partialorder %v1781, %v1783
      %v1785 = vsel %vm1784, %v1780, inf
      %1786 = vmin.xlane.f32.xlu0 %v1785
      %v1787 = vpop.xlane.xlu0 %1786
      %v1788 = vcvt.f32.s32 %v1787
      %v1789 = vcvt.f32.s32 %v1783
      %v1790 = vshll.u32 %v1789, 16
      %v1791 = vadd.s32 %v1790, %v1788
      %vm1792 = vcmp.lt.s32.totalorder %v1756, %v1758
      %v1793 = vsel %vm1792, %v1756, %v1758
      %vm1794 = vcmp.lt.s32.totalorder %v1757, %v1759
      %v1795 = vsel %vm1794, %v1757, %v1759
      %vm1796 = vcmp.lt.s32.totalorder %v1793, %v1760
      %v1797 = vsel %vm1796, %v1793, %v1760
      %vm1798 = vcmp.lt.s32.totalorder %v1795, %v1761
      %v1799 = vsel %vm1798, %v1795, %v1761
      %vm1800 = vcmp.lt.s32.totalorder %v1797, %v1762
      %v1801 = vsel %vm1800, %v1797, %v1762
      %vm1802 = vcmp.lt.s32.totalorder %v1799, %v1763
      %v1803 = vsel %vm1802, %v1799, %v1763
      %vm1804 = vcmp.lt.s32.totalorder %v1801, %v1803
      %v1805 = vsel %vm1804, %v1801, %v1803
      %v1806 = vand.u32 %v1805, 65535
      %v1807 = vshra.s32 %v1805, 16
      %v1808 = vcvt.s32.f32 %v1806
      %v1809 = vcvt.s32.f32 %v1807
      %1810 = vmin.xlane.f32.xlu0 %v1809
      %v1811 = vpop.xlane.xlu0 %1810
      %vm1812 = vcmp.eq.f32.partialorder %v1809, %v1811
      %v1813 = vsel %vm1812, %v1808, inf
      %1814 = vmin.xlane.f32.xlu0 %v1813
      %v1815 = vpop.xlane.xlu0 %1814
      %v1816 = vcvt.f32.s32 %v1815
      %v1817 = vcvt.f32.s32 %v1811
      %v1818 = vshll.u32 %v1817, 16
      %v1819 = vadd.s32 %v1818, %v1816
      %v1820 = vsel %vm1732, %v1147, -inf
      %v1821 = vsel %vm1733, %v1148, -inf
      %v1822 = vsel %vm1734, %v1149, -inf
      %v1823 = vsel %vm1735, %v1150, -inf
      %v1824 = vsel %vm1736, %v1151, -inf
      %v1825 = vsel %vm1737, %v1152, -inf
      %v1826 = vsel %vm1738, %v1153, -inf
      %v1827 = vsel %vm1739, %v1154, -inf
      %v1828 = vsel %vm1740, %v1155, -inf
      %v1829 = vsel %vm1741, %v1156, -inf
      %v1830 = vsel %vm1742, %v1157, -inf
      %v1831 = vsel %vm1743, %v1158, -inf
      %v1832 = vsel %vm1744, %v1159, -inf
      %v1833 = vsel %vm1745, %v1160, -inf
      %v1834 = vsel %vm1746, %v1161, -inf
      %v1835 = vsel %vm1747, %v1162, -inf
      %v1836 = vmax.f32 %v1820, %v1822
      %v1837 = vmax.f32 %v1821, %v1823
      %v1838 = vmax.f32 %v1836, %v1824
      %v1839 = vmax.f32 %v1837, %v1825
      %v1840 = vmax.f32 %v1838, %v1826
      %v1841 = vmax.f32 %v1839, %v1827
      %v1842 = vmax.f32 %v1840, %v1841
      %1843 = vmax.xlane.f32.xlu0 %v1842
      %v1844 = vpop.xlane.xlu0 %1843
      %v1845 = vmax.f32 %v1828, %v1830
      %v1846 = vmax.f32 %v1829, %v1831
      %v1847 = vmax.f32 %v1845, %v1832
      %v1848 = vmax.f32 %v1846, %v1833
      %v1849 = vmax.f32 %v1847, %v1834
      %v1850 = vmax.f32 %v1848, %v1835
      %v1851 = vmax.f32 %v1849, %v1850
      %1852 = vmax.xlane.f32.xlu0 %v1851
      %v1853 = vpop.xlane.xlu0 %1852
      %v1854 = vld [vmem:[#allocation4] sm:$0xff]
      %v1855 = vld [vmem:[#allocation4 + $0x8] sm:$0xff]
      %vm1856 = vcmp.gt.f32.partialorder %v1722, %v1854
      %vm1857 = vcmp.gt.f32.partialorder %v1731, %v1855
      %v1858 = vsel %vm1856, %v1722, %v1854
      %v1859 = vsel %vm1857, %v1731, %v1855
      %1860 = vst.msk [vmem:[#allocation4] sm:$0xff] %vm1275, %v1858
      %1861 = vst.msk [vmem:[#allocation4 + $0x8] sm:$0xff] %vm1275, %v1859
      %v1862 = vld [vmem:[#allocation5] sm:$0xff]
      %v1863 = vld [vmem:[#allocation5 + $0x8] sm:$0xff]
      %v1864 = vsel %vm1856, %v1791, %v1862
      %v1865 = vsel %vm1857, %v1819, %v1863
      %1866 = vst.msk [vmem:[#allocation5] sm:$0xff] %vm1275, %v1864
      %1867 = vst.msk [vmem:[#allocation5 + $0x8] sm:$0xff] %vm1275, %v1865
      %v1868 = vld [vmem:[#allocation6] sm:$0xff]
      %v1869 = vld [vmem:[#allocation6 + $0x8] sm:$0xff]
      %v1870 = vsel %vm1856, %v1844, %v1868
      %v1871 = vsel %vm1857, %v1853, %v1869
      %1872 = vst.msk [vmem:[#allocation6] sm:$0xff] %vm1275, %v1870
      %1873 = vst.msk [vmem:[#allocation6 + $0x8] sm:$0xff] %vm1275, %v1871
    $region29: #{_logits_processor_pallas.1} parent=1 // pred_fallthru
      _
    %p1874 = pneg %p1281
    // Predicated region
    $region30: #{_logits_processor_pallas.1} parent=1 // pred_check
      _
    $region31: #{_logits_processor_pallas.1} parent=1 // pred_check_branch
      %1876 = sbr.rel (%p1281) target = $region33
    $region32: #{_logits_processor_pallas.1} parent=1 // pred_region
      %vm1877 = vcmp.eq.f32.partialorder %v1147, %v1173
      %vm1878 = vcmp.eq.f32.partialorder %v1148, %v1173
      %vm1879 = vcmp.eq.f32.partialorder %v1149, %v1173
      %vm1880 = vcmp.eq.f32.partialorder %v1150, %v1173
      %vm1881 = vcmp.eq.f32.partialorder %v1151, %v1173
      %vm1882 = vcmp.eq.f32.partialorder %v1152, %v1173
      %vm1883 = vcmp.eq.f32.partialorder %v1153, %v1173
      %vm1884 = vcmp.eq.f32.partialorder %v1154, %v1173
      %vm1885 = vcmp.eq.f32.partialorder %v1155, %v1182
      %vm1886 = vcmp.eq.f32.partialorder %v1156, %v1182
      %vm1887 = vcmp.eq.f32.partialorder %v1157, %v1182
      %vm1888 = vcmp.eq.f32.partialorder %v1158, %v1182
      %vm1889 = vcmp.eq.f32.partialorder %v1159, %v1182
      %vm1890 = vcmp.eq.f32.partialorder %v1160, %v1182
      %vm1891 = vcmp.eq.f32.partialorder %v1161, %v1182
      %vm1892 = vcmp.eq.f32.partialorder %v1162, %v1182
      %v1893 = vsel %vm1877, %v1115, 2147483647
      %v1894 = vsel %vm1878, %v1116, 2147483647
      %v1895 = vsel %vm1879, %v1117, 2147483647
      %v1896 = vsel %vm1880, %v1118, 2147483647
      %v1897 = vsel %vm1881, %v1119, 2147483647
      %v1898 = vsel %vm1882, %v1120, 2147483647
      %v1899 = vsel %vm1883, %v1121, 2147483647
      %v1900 = vsel %vm1884, %v1122, 2147483647
      %v1901 = vsel %vm1885, %v1115, 2147483647
      %v1902 = vsel %vm1886, %v1116, 2147483647
      %v1903 = vsel %vm1887, %v1117, 2147483647
      %v1904 = vsel %vm1888, %v1118, 2147483647
      %v1905 = vsel %vm1889, %v1119, 2147483647
      %v1906 = vsel %vm1890, %v1120, 2147483647
      %v1907 = vsel %vm1891, %v1121, 2147483647
      %v1908 = vsel %vm1892, %v1122, 2147483647
      %vm1909 = vcmp.lt.s32.totalorder %v1893, %v1895
      %v1910 = vsel %vm1909, %v1893, %v1895
      %vm1911 = vcmp.lt.s32.totalorder %v1894, %v1896
      %v1912 = vsel %vm1911, %v1894, %v1896
      %vm1913 = vcmp.lt.s32.totalorder %v1910, %v1897
      %v1914 = vsel %vm1913, %v1910, %v1897
      %vm1915 = vcmp.lt.s32.totalorder %v1912, %v1898
      %v1916 = vsel %vm1915, %v1912, %v1898
      %vm1917 = vcmp.lt.s32.totalorder %v1914, %v1899
      %v1918 = vsel %vm1917, %v1914, %v1899
      %vm1919 = vcmp.lt.s32.totalorder %v1916, %v1900
      %v1920 = vsel %vm1919, %v1916, %v1900
      %vm1921 = vcmp.lt.s32.totalorder %v1918, %v1920
      %v1922 = vsel %vm1921, %v1918, %v1920
      %v1923 = vand.u32 %v1922, 65535
      %v1924 = vshra.s32 %v1922, 16
      %v1925 = vcvt.s32.f32 %v1923
      %v1926 = vcvt.s32.f32 %v1924
      %1927 = vmin.xlane.f32.xlu0 %v1926
      %v1928 = vpop.xlane.xlu0 %1927
      %vm1929 = vcmp.eq.f32.partialorder %v1926, %v1928
      %v1930 = vsel %vm1929, %v1925, inf
      %1931 = vmin.xlane.f32.xlu0 %v1930
      %v1932 = vpop.xlane.xlu0 %1931
      %v1933 = vcvt.f32.s32 %v1932
      %v1934 = vcvt.f32.s32 %v1928
      %v1935 = vshll.u32 %v1934, 16
      %v1936 = vadd.s32 %v1935, %v1933
      %vm1937 = vcmp.lt.s32.totalorder %v1901, %v1903
      %v1938 = vsel %vm1937, %v1901, %v1903
      %vm1939 = vcmp.lt.s32.totalorder %v1902, %v1904
      %v1940 = vsel %vm1939, %v1902, %v1904
      %vm1941 = vcmp.lt.s32.totalorder %v1938, %v1905
      %v1942 = vsel %vm1941, %v1938, %v1905
      %vm1943 = vcmp.lt.s32.totalorder %v1940, %v1906
      %v1944 = vsel %vm1943, %v1940, %v1906
      %vm1945 = vcmp.lt.s32.totalorder %v1942, %v1907
      %v1946 = vsel %vm1945, %v1942, %v1907
      %vm1947 = vcmp.lt.s32.totalorder %v1944, %v1908
      %v1948 = vsel %vm1947, %v1944, %v1908
      %vm1949 = vcmp.lt.s32.totalorder %v1946, %v1948
      %v1950 = vsel %vm1949, %v1946, %v1948
      %v1951 = vand.u32 %v1950, 65535
      %v1952 = vshra.s32 %v1950, 16
      %v1953 = vcvt.s32.f32 %v1951
      %v1954 = vcvt.s32.f32 %v1952
      %1955 = vmin.xlane.f32.xlu0 %v1954
      %v1956 = vpop.xlane.xlu0 %1955
      %vm1957 = vcmp.eq.f32.partialorder %v1954, %v1956
      %v1958 = vsel %vm1957, %v1953, inf
      %1959 = vmin.xlane.f32.xlu0 %v1958
      %v1960 = vpop.xlane.xlu0 %1959
      %v1961 = vcvt.f32.s32 %v1960
      %v1962 = vcvt.f32.s32 %v1956
      %v1963 = vshll.u32 %v1962, 16
      %v1964 = vadd.s32 %v1963, %v1961
      %v1965 = vsel %vm1877, %v1147, -inf
      %v1966 = vsel %vm1878, %v1148, -inf
      %v1967 = vsel %vm1879, %v1149, -inf
      %v1968 = vsel %vm1880, %v1150, -inf
      %v1969 = vsel %vm1881, %v1151, -inf
      %v1970 = vsel %vm1882, %v1152, -inf
      %v1971 = vsel %vm1883, %v1153, -inf
      %v1972 = vsel %vm1884, %v1154, -inf
      %v1973 = vsel %vm1885, %v1155, -inf
      %v1974 = vsel %vm1886, %v1156, -inf
      %v1975 = vsel %vm1887, %v1157, -inf
      %v1976 = vsel %vm1888, %v1158, -inf
      %v1977 = vsel %vm1889, %v1159, -inf
      %v1978 = vsel %vm1890, %v1160, -inf
      %v1979 = vsel %vm1891, %v1161, -inf
      %v1980 = vsel %vm1892, %v1162, -inf
      %v1981 = vmax.f32 %v1965, %v1967
      %v1982 = vmax.f32 %v1966, %v1968
      %v1983 = vmax.f32 %v1981, %v1969
      %v1984 = vmax.f32 %v1982, %v1970
      %v1985 = vmax.f32 %v1983, %v1971
      %v1986 = vmax.f32 %v1984, %v1972
      %v1987 = vmax.f32 %v1985, %v1986
      %1988 = vmax.xlane.f32.xlu0 %v1987
      %v1989 = vpop.xlane.xlu0 %1988
      %v1990 = vmax.f32 %v1973, %v1975
      %v1991 = vmax.f32 %v1974, %v1976
      %v1992 = vmax.f32 %v1990, %v1977
      %v1993 = vmax.f32 %v1991, %v1978
      %v1994 = vmax.f32 %v1992, %v1979
      %v1995 = vmax.f32 %v1993, %v1980
      %v1996 = vmax.f32 %v1994, %v1995
      %1997 = vmax.xlane.f32.xlu0 %v1996
      %v1998 = vpop.xlane.xlu0 %1997
      %v1999 = vld [vmem:[#allocation4] sm:$0xff]
      %v2000 = vld [vmem:[#allocation4 + $0x8] sm:$0xff]
      %vm2001 = vcmp.gt.f32.partialorder %v1173, %v1999
      %vm2002 = vcmp.gt.f32.partialorder %v1182, %v2000
      %v2003 = vsel %vm2001, %v1173, %v1999
      %v2004 = vsel %vm2002, %v1182, %v2000
      %2005 = vst.msk [vmem:[#allocation4] sm:$0xff] %vm1275, %v2003
      %2006 = vst.msk [vmem:[#allocation4 + $0x8] sm:$0xff] %vm1275, %v2004
      %v2007 = vld [vmem:[#allocation5] sm:$0xff]
      %v2008 = vld [vmem:[#allocation5 + $0x8] sm:$0xff]
      %v2009 = vsel %vm2001, %v1936, %v2007
      %v2010 = vsel %vm2002, %v1964, %v2008
      %2011 = vst.msk [vmem:[#allocation5] sm:$0xff] %vm1275, %v2009
      %2012 = vst.msk [vmem:[#allocation5 + $0x8] sm:$0xff] %vm1275, %v2010
      %v2013 = vld [vmem:[#allocation6] sm:$0xff]
      %v2014 = vld [vmem:[#allocation6 + $0x8] sm:$0xff]
      %v2015 = vsel %vm2001, %v1989, %v2013
      %v2016 = vsel %vm2002, %v1998, %v2014
      %2017 = vst.msk [vmem:[#allocation6] sm:$0xff] %vm1275, %v2015
      %2018 = vst.msk [vmem:[#allocation6 + $0x8] sm:$0xff] %vm1275, %v2016
    $region33: #{_logits_processor_pallas.1} parent=1 // pred_fallthru
      _
    // Predicated region
    $region34: #{_logits_processor_pallas.1} parent=1 // pred_check
      %p2019 = pneg %p56
    $region35: #{_logits_processor_pallas.1} parent=1 // pred_check_branch
      %2021 = sbr.rel (%p2019) target = $region37
    $region36: #{_logits_processor_pallas.1} parent=1 // pred_region
      %v2022 = vld [vmem:[#allocation3] sm:$0xff]
      %v2023 = vld [vmem:[#allocation3 + $0x8] sm:$0xff]
      %vm2024 = vcmp.gt.f32.partialorder %v2022, 0.0
      %vm2025 = vcmp.gt.f32.partialorder %v2023, 0.0
      %v2026 = vld [vmem:[#allocation2] sm:$0xff]
      %v2027 = vld [vmem:[#allocation2 + $0x8] sm:$0xff]
      %v2028 = vlog2.pop %v2022
      %v2029 = vmul.f32 %v2028, 0.6931472
      %v2030 = vlog2.pop %v2023
      %v2031 = vmul.f32 %v2030, 0.6931472
      %v2032 = vadd.f32 %v2026, %v2029
      %v2033 = vadd.f32 %v2027, %v2031
      %v2034 = vsel %vm2024, %v2032, -inf
      %v2035 = vsel %vm2025, %v2033, -inf
      %2036 = vst.msk [vmem:[%s5] sm:$0xff] %vm1275, %v2034
      %2037 = vst.msk [vmem:[%s5 + $0x8] sm:$0xff] %vm1275, %v2035
      %v2038 = vld [vmem:[#allocation4] sm:$0xff]
      %v2039 = vld [vmem:[#allocation4 + $0x8] sm:$0xff]
      %2040 = vst.msk [vmem:[#allocation12] sm:$0xff] %vm1275, %v2038
      %2041 = vst.msk [vmem:[#allocation12 + $0x8] sm:$0xff] %vm1275, %v2039
      %v2042 = vld [vmem:[#allocation5] sm:$0xff]
      %v2043 = vld [vmem:[#allocation5 + $0x8] sm:$0xff]
      %2044 = vst.msk [vmem:[%s7] sm:$0xff] %vm1275, %v2042
      %2045 = vst.msk [vmem:[%s7 + $0x8] sm:$0xff] %vm1275, %v2043
      %v2046 = vld [vmem:[#allocation6] sm:$0xff]
      %v2047 = vld [vmem:[#allocation6 + $0x8] sm:$0xff]
      %2048 = vst.msk [vmem:[%s8] sm:$0xff] %vm1275, %v2046
      %2049 = vst.msk [vmem:[%s8 + $0x8] sm:$0xff] %vm1275, %v2047
    $region37: #{_logits_processor_pallas.1} parent=1 // pred_fallthru
      _
    // Predicated region
    $region38: #{_logits_processor_pallas.1} parent=1 // pred_check
      _
    $region39: #{_logits_processor_pallas.1} parent=1 // pred_check_branch
      %2051 = sbr.rel (0) target = $region41
    $region40: #{_logits_processor_pallas.1} parent=1 // pred_region
      _
    $region41: #{_logits_processor_pallas.1} parent=1 // pred_fallthru
      _
    // Predicated region
    $region42: #{_logits_processor_pallas.1} parent=1 // pred_check
      _
    $region43: #{_logits_processor_pallas.1} parent=1 // pred_check_branch
      %2053 = sbr.rel (0) target = $region45
    $region44: #{_logits_processor_pallas.1} parent=1 // pred_region
      %2055 = vsyncadd [#allocation11], 0
      %s2056 = sshll.u32 [#allocation12], 4
      %s2057 = int_to_ptr.vmem [resolvable:$true] %s2056
      %s2058 = sshll.u32 %s6, 4
      %s2059 = int_to_ptr.hbm [resolvable:$true] %s2058
      %2064 = dma.vmem_to_hbm [thread:$0]  %s2057, 256, %s2059, [#allocation11], 128, 128, 8
    $region45: #{_logits_processor_pallas.1} parent=1 // pred_fallthru
      _
    // Predicated region
    $region46: #{_logits_processor_pallas.1} parent=1 // pred_check
      _
    $region47: #{_logits_processor_pallas.1} parent=1 // pred_check_branch
      %2066 = sbr.rel (0) target = $region49
    $region48: #{_logits_processor_pallas.1} parent=1 // pred_region
      _
    $region49: #{_logits_processor_pallas.1} parent=1 // pred_fallthru
      _
    // Predicated region
    $region50: #{_logits_processor_pallas.1} parent=1 // pred_check
      _
    $region51: #{_logits_processor_pallas.1} parent=1 // pred_check_branch
      %2068 = sbr.rel (0) target = $region53
    $region52: #{_logits_processor_pallas.1} parent=1 // pred_region
      _
    $region53: #{_logits_processor_pallas.1} parent=1 // pred_fallthru
      _
    // Predicated region
    $region54: #{_logits_processor_pallas.1} parent=1 // pred_check
      _
    $region55: #{_logits_processor_pallas.1} parent=1 // pred_check_branch
      %2070 = sbr.rel (0) target = $region57
    $region56: #{_logits_processor_pallas.1} parent=1 // pred_region
      _
    $region57: #{_logits_processor_pallas.1} parent=1 // pred_fallthru
      _
    // Predicated region
    $region58: #{_logits_processor_pallas.1} parent=1 // pred_check
      _
    $region59: #{_logits_processor_pallas.1} parent=1 // pred_check_branch
      %2072 = sbr.rel (0) target = $region61
    $region60: #{_logits_processor_pallas.1} parent=1 // pred_region
      %2074 = dma.done [#allocation11], 256
    $region61: #{_logits_processor_pallas.1} parent=1 // pred_fallthru
      _
    // Predicated region
    $region62: #{_logits_processor_pallas.1} parent=1 // pred_check
      _
    $region63: #{_logits_processor_pallas.1} parent=1 // pred_check_branch
      %2076 = sbr.rel (0) target = $region65
    $region64: #{_logits_processor_pallas.1} parent=1 // pred_region
      _
    $region65: #{_logits_processor_pallas.1} parent=1 // pred_fallthru
      _
    // Predicated region
    $region66: #{_logits_processor_pallas.1} parent=1 // pred_check
      _
    $region67: #{_logits_processor_pallas.1} parent=1 // pred_check_branch
      %2078 = sbr.rel (0) target = $region69
    $region68: #{_logits_processor_pallas.1} parent=1 // pred_region
      _
    $region69: #{_logits_processor_pallas.1} parent=1 // pred_fallthru
      _
    %2079 = vsyncpa [#allocation10], 1
    %2080 = vsyncpa [#allocation11], 1

</llo_original>
